<compile_context>
chip_gen: v5e
topology: v5e:2x2
jax: 0.10.0
libtpu: 0.0.40
codegen_flags: <defaults>
</compile_context>

<pallas_src>
import functools
import math

import jax
import jax.numpy as jnp
from jax.experimental import pallas as pl
from jax.experimental.pallas import tpu as pltpu

LANE = 128           # lane width: every feature / contraction dim padded to this
K_TILE = 2048        # contraction tile over the node (column) dim of A


def _cdiv(a, b):
    return -(-a // b)


def _round_up(x, m):
    return _cdiv(x, m) * m


def _vmem_capacity_bytes():
    try:
        info = pltpu.get_tpu_info()
        cap = getattr(info, "vmem_capacity_bytes", None)
        if cap:
            return int(cap)
    except Exception:
        pass
    return 64 * 1024 * 1024          # conservative (v7x-sized) fallback


_VMEM_CAP = _vmem_capacity_bytes()
_VMEM_BUDGET = int(_VMEM_CAP * 3 // 4)     # leave headroom for the compiler
# 512-row strips fit comfortably on 128-MiB VMEM parts (v5e/v6e); 256 on the
# 64-MiB v7x (also reaches >=2 parallel row tiles sooner for its 2 TCs).
ROW_TILE = 512 if _VMEM_CAP >= 96 * 1024 * 1024 else 256


def _dim_tiles(n, max_tile):
    """(padded_n, tile, n_tiles): padded_n = tile * n_tiles, tile % 128 == 0."""
    n128 = _round_up(max(int(n), 1), LANE)
    if n128 <= max_tile:
        return n128, n128, 1
    nt = _cdiv(n128, max_tile)
    tile = _round_up(_cdiv(n128, nt), LANE)
    return tile * nt, tile, nt


def _pad2(x, rows, cols):
    r, c = x.shape
    return jnp.pad(x, ((0, rows - r), (0, cols - c)))


def _pad_adj(a_bf16):
    """Zero-pad a bf16 adjacency: rows -> row-tile multiple, cols -> K-tile."""
    m, k = a_bf16.shape
    mpad, _, _ = _dim_tiles(m, ROW_TILE)
    kpad, _, _ = _dim_tiles(k, K_TILE)
    return _pad2(a_bf16, mpad, kpad)


def _cparams(sems, need_bytes):
    limit = int(min(_VMEM_BUDGET, max(2 * need_bytes, 32 * 1024 * 1024)))
    return pltpu.CompilerParams(dimension_semantics=sems,
                                vmem_limit_bytes=limit)


# ----------------------------------------------------------------------------
# Pallas kernel bodies
# ----------------------------------------------------------------------------
def _xw_kernel(x_ref, w_ref, o_ref):
    o_ref[...] = jnp.dot(x_ref[...], w_ref[...],
                         preferred_element_type=jnp.float32).astype(o_ref.dtype)


def _xw_concat_kernel(x1_ref, w1_ref, x2_ref, w2_ref, o_ref):
    acc = jnp.dot(x1_ref[...], w1_ref[...], preferred_element_type=jnp.float32)
    acc = acc + jnp.dot(x2_ref[...], w2_ref[...],
                        preferred_element_type=jnp.float32)
    o_ref[...] = acc.astype(o_ref.dtype)


def _ax_kernel(a_ref, xw_ref, b_ref, o_ref, acc_ref):
    @pl.when(pl.program_id(1) == 0)
    def _():
        acc_ref[...] = jnp.zeros_like(acc_ref)

    acc_ref[...] += jnp.dot(a_ref[...], xw_ref[...],
                            preferred_element_type=jnp.float32)

    @pl.when(pl.program_id(1) == pl.num_programs(1) - 1)
    def _():
        o_ref[...] = (acc_ref[...] + b_ref[...]).astype(o_ref.dtype)


def _ax_skip_kernel(a_ref, xw_ref, b_ref, s_ref, o_ref, acc_ref):
    @pl.when(pl.program_id(1) == 0)
    def _():
        acc_ref[...] = jnp.zeros_like(acc_ref)

    acc_ref[...] += jnp.dot(a_ref[...], xw_ref[...],
                            preferred_element_type=jnp.float32)

    @pl.when(pl.program_id(1) == pl.num_programs(1) - 1)
    def _():
        o_ref[...] = (acc_ref[...] + b_ref[...] +
                      s_ref[...].astype(jnp.float32)).astype(o_ref.dtype)


# ----------------------------------------------------------------------------
# Pallas wrappers
# ----------------------------------------------------------------------------
def _xw_pallas(x, x2, w, w2, kpad, tk, nk):
    """Stage 1: XW = X @ W [+ X2 @ W2] as bf16, rows zero-padded to kpad."""
    din, dout = w.shape
    x_p = _pad2(x, kpad, din).astype(jnp.bfloat16)
    inputs = [x_p, w]
    in_specs = [pl.BlockSpec((tk, din), lambda k: (k, 0)),
                pl.BlockSpec((din, dout), lambda k: (0, 0))]
    kernel = _xw_kernel
    flops = 2 * kpad * din * dout
    need = 2 * (tk * din * 2 + din * dout * 2 + tk * dout * 2)
    if x2 is not None:
        din2 = w2.shape[0]
        x2_p = _pad2(x2, kpad, din2).astype(jnp.bfloat16)
        inputs += [x2_p, w2]
        in_specs += [pl.BlockSpec((tk, din2), lambda k: (k, 0)),
                     pl.BlockSpec((din2, dout), lambda k: (0, 0))]
        kernel = _xw_concat_kernel
        flops += 2 * kpad * din2 * dout
        need += 2 * (tk * din2 * 2 + din2 * dout * 2)
    bytes_acc = sum(int(a.size) * a.dtype.itemsize for a in inputs)
    bytes_acc += kpad * dout * 2

    return pl.pallas_call(
        kernel,
        grid=(nk,),
        in_specs=in_specs,
        out_specs=pl.BlockSpec((tk, dout), lambda k: (k, 0)),
        out_shape=jax.ShapeDtypeStruct((kpad, dout), jnp.bfloat16),
        compiler_params=_cparams(("parallel",), need),
        cost_estimate=pl.CostEstimate(flops=flops, transcendentals=0,
                                      bytes_accessed=bytes_acc),
    )(*inputs)


def gcn_pallas(a_pad, m, k, x, w, b, *, x2=None, w2=None, skip_pad=None):
    """Fused GCN:  out = A @ (X @ W [+ X2 @ W2]) + b [+ skip]

    a_pad:    (mpad, kpad) bf16 adjacency, already zero-padded and cached.
    x / x2:   (k, *) activations with the real (unpadded) node rows.
    w / w2:   (din_pad, dout_pad) bf16 weights; b: (1, dout_pad) f32.
    skip_pad: optional (mpad, dout_pad) bf16 residual.
    Returns the (mpad, dout_pad) bf16 output. Padded rows contain only bias /
    skip garbage; callers must slice back to the real node count before use.
    """
    mpad, tm, nm = _dim_tiles(m, ROW_TILE)
    kpad, tk, nk = _dim_tiles(k, K_TILE)
    assert a_pad.shape == (mpad, kpad), (a_pad.shape, mpad, kpad)
    dout = w.shape[1]

    # stage 1: XW in HBM (only N x dout bf16 -- trivial vs. the N^2 A read)
    xw = _xw_pallas(x, x2, w, w2, kpad, tk, nk)

    # stage 2: row-tiled x K-tiled A contraction with f32 VMEM accumulator
    inputs = [a_pad, xw, b.astype(jnp.float32)]
    in_specs = [pl.BlockSpec((tm, tk), lambda i, kk: (i, kk)),
                pl.BlockSpec((tk, dout), lambda i, kk: (kk, 0)),
                pl.BlockSpec((1, dout), lambda i, kk: (0, 0))]
    kernel = _ax_kernel
    need = 2 * (tm * tk * 2 + tk * dout * 2 + dout * 4 + tm * dout * 2)
    if skip_pad is not None:
        assert skip_pad.shape == (mpad, dout), (skip_pad.shape, mpad, dout)
        inputs.append(skip_pad.astype(jnp.bfloat16))
        in_specs.append(pl.BlockSpec((tm, dout), lambda i, kk: (i, 0)))
        kernel = _ax_skip_kernel
        need += 2 * tm * dout * 2
    need += tm * dout * 4                      # f32 accumulator scratch

    flops = 2 * mpad * kpad * dout
    bytes_acc = (int(a_pad.size) * 2 + nm * int(xw.size) * 2 +
                 mpad * dout * 2 + dout * 4 +
                 (mpad * dout * 2 if skip_pad is not None else 0))

    return pl.pallas_call(
        kernel,
        grid=(nm, nk),
        in_specs=in_specs,
        out_specs=pl.BlockSpec((tm, dout), lambda i, kk: (i, 0)),
        out_shape=jax.ShapeDtypeStruct((mpad, dout), jnp.bfloat16),
        scratch_shapes=[pltpu.VMEM((tm, dout), jnp.float32)],
        compiler_params=_cparams(("parallel", "arbitrary"), need),
        cost_estimate=pl.CostEstimate(flops=flops, transcendentals=0,
                                      bytes_accessed=bytes_acc),
    )(*inputs)


# ----------------------------------------------------------------------------
# Parameter init (PyTorch nn.Linear-style) and lane-padded preparation
# ----------------------------------------------------------------------------
def _linear_params(key, in_dim, out_dim):
    kw, kb = jax.random.split(key)
    bound = 1.0 / math.sqrt(in_dim)
    # stored (in_dim, out_dim) so kernels compute x @ W directly
    W = jax.random.uniform(kw, (in_dim, out_dim), jnp.float32, -bound, bound)
    b = jax.random.uniform(kb, (out_dim,), jnp.float32, -bound, bound)
    return W, b


def init_graph_unet_params(key, ks, in_dim, out_dim, dim):
    keys = jax.random.split(key, 3 + 3 * len(ks))
    params = {"start": _linear_params(keys[0], in_dim, dim),
              "bottom": _linear_params(keys[1], dim, dim),
              "end": _linear_params(keys[2], 2 * dim, out_dim),
              "down": [], "up": [], "pool": []}
    for i in range(len(ks)):
        params["down"].append(_linear_params(keys[3 + 3 * i], dim, dim))
        params["up"].append(_linear_params(keys[4 + 3 * i], dim, dim))
        params["pool"].append(_linear_params(keys[5 + 3 * i], dim, 1))
    return params


def prepare_params(raw, in_dim, out_dim, dim):
    """Zero-pad all weights to 128-lane multiples (bf16 weights, f32 biases).

    The pool score projection is folded into the down-GCN weights:
      y = A @ (X @ W) + b ;  score = y @ Wp + bp
        = A @ (X @ [W | W @ Wp]) + [b | b @ Wp + bp]     (score = column D)
    """
    D = _round_up(dim, LANE)
    din0 = _round_up(in_dim, LANE)
    dout = _round_up(out_dim, LANE)

    def pad_w(w, r, c):
        return _pad2(jnp.asarray(w, jnp.float32), r, c).astype(jnp.bfloat16)

    def pad_b(b, c):
        return _pad2(jnp.asarray(b, jnp.float32).reshape(1, -1), 1, c)

    pp = {
        "start": (pad_w(raw["start"][0], din0, D), pad_b(raw["start"][1], D)),
        "bottom": (pad_w(raw["bottom"][0], D, D), pad_b(raw["bottom"][1], D)),
        "up": [(pad_w(w, D, D), pad_b(b, D)) for (w, b) in raw["up"]],
        "down_pool": [],
    }
    for (wd, bd), (wp, bp) in zip(raw["down"], raw["pool"]):
        w_cat = jnp.zeros((D, D + LANE), jnp.float32)
        w_cat = w_cat.at[:dim, :dim].set(wd)
        w_cat = w_cat.at[:dim, D].set((wd @ wp)[:, 0])
        b_cat = jnp.zeros((1, D + LANE), jnp.float32)
        b_cat = b_cat.at[0, :dim].set(bd)
        b_cat = b_cat.at[0, D].set(jnp.dot(bd, wp[:, 0]) + bp[0])
        pp["down_pool"].append((w_cat.astype(jnp.bfloat16), b_cat))

    we, be = raw["end"]
    pp["end_w1"] = pad_w(we[:dim], D, dout)     # half acting on X
    pp["end_w2"] = pad_w(we[dim:], D, dout)     # half acting on org_X
    pp["end_b"] = pad_b(be, dout)
    return pp


# ----------------------------------------------------------------------------
# GraphUnet forward (jit this)
# ----------------------------------------------------------------------------
def graph_unet_forward(pp, A, X, ks, out_dim, dim):
    l_n = len(ks)
    n0 = A.shape[0]
    D = _round_up(dim, LANE)

    # Cache the level-0 padded bf16 adjacency once; it is reused by the start
    # GCN, down GCN 0, the last up GCN and the end GCN.
    a_bf = A.astype(jnp.bfloat16)
    a_pad0 = _pad_adj(a_bf)

    # start GCN (Dropout p=0.3 is identity in eval mode)
    xc = gcn_pallas(a_pad0, n0, n0, X, *pp["start"])
    org_x = xc

    adj_bf, down_outs, indices, sizes = [], [], [], []
    a_cur_bf, a_cur_pad, n_cur = a_bf, a_pad0, n0

    for i in range(l_n):
        # down GCN with the pool score projection folded into W_cat / b_cat:
        # columns [:D] = GCN output, column D = raw pool score.
        w_cat, b_cat = pp["down_pool"][i]
        yc = gcn_pallas(a_cur_pad, n_cur, n_cur, xc[:n_cur], w_cat, b_cat)
        xc = yc[:, :D]
        adj_bf.append(a_cur_bf)
        down_outs.append(xc)
        sizes.append(n_cur)

        # GraphPool (data-dependent top-k / gather) -- plain JAX.
        scores = jax.nn.sigmoid(yc[:n_cur, D].astype(jnp.float32) / 100.0)
        k_nodes = int(ks[i] * n_cur)     # matches PyTorch int(k * num_nodes)
        values, idx = jax.lax.top_k(scores, k_nodes)
        indices.append(idx)
        xc = xc[idx, :].astype(jnp.float32) * values[:, None]
        a_cur_bf = a_cur_bf[idx, :][:, idx]
        a_cur_pad = _pad_adj(a_cur_bf)
        n_cur = k_nodes

    xc = gcn_pallas(a_cur_pad, n_cur, n_cur, xc[:n_cur], *pp["bottom"])

    for i in range(l_n):
        u = l_n - i - 1
        idx = indices[u]
        k_prev = idx.shape[0]
        n_full = sizes[u]
        # sparse unpool: A_full @ unpool(X) == A_full[:, idx] @ X_pooled,
        # gathered straight from the cached bf16 adjacency of level u.
        a_cols_pad = _pad_adj(adj_bf[u][:, idx])
        xc = gcn_pallas(a_cols_pad, n_full, k_prev, xc[:k_prev],
                        *pp["up"][u], skip_pad=down_outs[u])

    # end GCN with the [X, org_X] concat folded in (level-0 adjacency).
    xc = gcn_pallas(a_pad0, n0, n0, xc[:n0], pp["end_w1"], pp["end_b"],
                    x2=org_x[:n0], w2=pp["end_w2"])
    return xc[:n0, :out_dim].astype(jnp.float32)


# ----------------------------------------------------------------------------
# Main
# ----------------------------------------------------------------------------
if __name__ == "__main__":
    key = jax.random.PRNGKey(0)
    k_param, k_a, k_x = jax.random.split(key, 3)

    # Small synthetic graph
    num_nodes = 16
    in_dim = 8
    out_dim = 8
    dim = 32
    ks = (0.9, 0.7)

    raw_params = init_graph_unet_params(k_param, ks, in_dim, out_dim, dim)
    params = prepare_params(raw_params, in_dim, out_dim, dim)

    # Dense (symmetric-ish) adjacency and node features
    A_raw = jax.random.uniform(k_a, (num_nodes, num_nodes), jnp.float32)
    A = (A_raw + A_raw.T) / 2.0
    X = jax.random.normal(k_x, (num_nodes, in_dim), jnp.float32)

    fwd = jax.jit(functools.partial(graph_unet_forward, ks=ks,
                                    out_dim=out_dim, dim=dim))
    out = jax.block_until_ready(fwd(params, A, X))

    assert out.shape == (num_nodes, out_dim), out.shape
    assert jnp.isfinite(out).all()
    print("KERNEL_OK")
</pallas_src>

<mosaic_0001>
module attributes {stable_mosaic.version = 11 : i64} {
  func.func @_xw_kernel(%arg0: i32, %arg1: memref<128x128xbf16, #tpu.memory_space<vmem>>, %arg2: memref<128x256xbf16, #tpu.memory_space<vmem>>, %arg3: memref<128x256xbf16, #tpu.memory_space<vmem>>) attributes {dimension_semantics = [#tpu.dimension_semantics<parallel>], iteration_bounds = array<i64: 1>, scalar_prefetch = 0 : i64, scratch_operands = 0 : i64, tpu.core_type = #tpu.core_type<tc>, window_params = [{transform_indices = @transform_0, window_bounds = array<i64: 128, 128>}, {pipeline_mode = #tpu.pipeline_mode<synchronous>, transform_indices = @transform_1, window_bounds = array<i64: 128, 256>}, {transform_indices = @transform_2, window_bounds = array<i64: 128, 256>}]} {
    %c0 = arith.constant 0 : index
    %c0_0 = arith.constant 0 : index
    %0 = vector.load %arg1[%c0, %c0_0] : memref<128x128xbf16, #tpu.memory_space<vmem>>, vector<128x128xbf16>
    %c0_1 = arith.constant 0 : index
    %c0_2 = arith.constant 0 : index
    %1 = vector.load %arg2[%c0_1, %c0_2] : memref<128x256xbf16, #tpu.memory_space<vmem>>, vector<128x256xbf16>
    %cst = arith.constant dense<0.000000e+00> : vector<128x256xf32>
    %2 = tpu.matmul %0, %1, %cst {dimension_numbers = #tpu.dot_dimension_numbers<[1], [0], [0], [1], [0, 0, 1, 1], [], []>} : vector<128x128xbf16>, vector<128x256xbf16>, vector<128x256xf32> -> vector<128x256xf32>
    %3 = arith.truncf %2 : vector<128x256xf32> to vector<128x256xbf16>
    %c0_3 = arith.constant 0 : index
    %c0_4 = arith.constant 0 : index
    %4 = vector.load %arg3[%c0_3, %c0_4] : memref<128x256xbf16, #tpu.memory_space<vmem>>, vector<128x256xbf16>
    tpu.vector_store %arg3[%c0_3, %c0_4], %3 {strides = array<i32>} : memref<128x256xbf16, #tpu.memory_space<vmem>>, vector<128x256xbf16>,
    return
  }
  func.func @transform_0(%arg0: i32) -> (i32, i32) {
    %c0_i32 = arith.constant 0 : i32
    %c0_i32_0 = arith.constant 0 : i32
    return %arg0, %c0_i32 : i32, i32
  }
  func.func @transform_1(%arg0: i32) -> (i32, i32) {
    %c0_i32 = arith.constant 0 : i32
    %c0_i32_0 = arith.constant 0 : i32
    %c0_i32_1 = arith.constant 0 : i32
    return %c0_i32, %c0_i32_0 : i32, i32
  }
  func.func @transform_2(%arg0: i32) -> (i32, i32) {
    %c0_i32 = arith.constant 0 : i32
    %c0_i32_0 = arith.constant 0 : i32
    return %arg0, %c0_i32 : i32, i32
  }
}

module attributes {stable_mosaic.version = 11 : i64} {
  func.func @_xw_kernel(%arg0: i32, %arg1: memref<128x128xbf16, #tpu.memory_space<vmem>>, %arg2: memref<128x128xbf16, #tpu.memory_space<vmem>>, %arg3: memref<128x128xbf16, #tpu.memory_space<vmem>>) attributes {dimension_semantics = [#tpu.dimension_semantics<parallel>], iteration_bounds = array<i64: 1>, scalar_prefetch = 0 : i64, scratch_operands = 0 : i64, tpu.core_type = #tpu.core_type<tc>, window_params = [{transform_indices = @transform_0, window_bounds = array<i64: 128, 128>}, {pipeline_mode = #tpu.pipeline_mode<synchronous>, transform_indices = @transform_1, window_bounds = array<i64: 128, 128>}, {transform_indices = @transform_2, window_bounds = array<i64: 128, 128>}]} {
    %c0 = arith.constant 0 : index
    %c0_0 = arith.constant 0 : index
    %0 = vector.load %arg1[%c0, %c0_0] : memref<128x128xbf16, #tpu.memory_space<vmem>>, vector<128x128xbf16>
    %c0_1 = arith.constant 0 : index
    %c0_2 = arith.constant 0 : index
    %1 = vector.load %arg2[%c0_1, %c0_2] : memref<128x128xbf16, #tpu.memory_space<vmem>>, vector<128x128xbf16>
    %cst = arith.constant dense<0.000000e+00> : vector<128x128xf32>
    %2 = tpu.matmul %0, %1, %cst {dimension_numbers = #tpu.dot_dimension_numbers<[1], [0], [0], [1], [0, 0, 1, 1], [], []>} : vector<128x128xbf16>, vector<128x128xbf16>, vector<128x128xf32> -> vector<128x128xf32>
    %3 = arith.truncf %2 : vector<128x128xf32> to vector<128x128xbf16>
    %c0_3 = arith.constant 0 : index
    %c0_4 = arith.constant 0 : index
    %4 = vector.load %arg3[%c0_3, %c0_4] : memref<128x128xbf16, #tpu.memory_space<vmem>>, vector<128x128xbf16>
    tpu.vector_store %arg3[%c0_3, %c0_4], %3 {strides = array<i32>} : memref<128x128xbf16, #tpu.memory_space<vmem>>, vector<128x128xbf16>,
    return
  }
  func.func @transform_0(%arg0: i32) -> (i32, i32) {
    %c0_i32 = arith.constant 0 : i32
    %c0_i32_0 = arith.constant 0 : i32
    return %arg0, %c0_i32 : i32, i32
  }
  func.func @transform_1(%arg0: i32) -> (i32, i32) {
    %c0_i32 = arith.constant 0 : i32
    %c0_i32_0 = arith.constant 0 : i32
    %c0_i32_1 = arith.constant 0 : i32
    return %c0_i32, %c0_i32_0 : i32, i32
  }
  func.func @transform_2(%arg0: i32) -> (i32, i32) {
    %c0_i32 = arith.constant 0 : i32
    %c0_i32_0 = arith.constant 0 : i32
    return %arg0, %c0_i32 : i32, i32
  }
}

module attributes {stable_mosaic.version = 11 : i64} {
  func.func @_ax_kernel(%arg0: i32, %arg1: i32, %arg2: memref<128x128xbf16, #tpu.memory_space<vmem>>, %arg3: memref<128x128xbf16, #tpu.memory_space<vmem>>, %arg4: memref<1x128xf32, #tpu.memory_space<vmem>>, %arg5: memref<128x128xbf16, #tpu.memory_space<vmem>>, %arg6: memref<128x128xf32, #tpu.memory_space<vmem>>) attributes {dimension_semantics = [#tpu.dimension_semantics<parallel>, #tpu.dimension_semantics<arbitrary>], iteration_bounds = array<i64: 1, 1>, scalar_prefetch = 0 : i64, scratch_operands = 1 : i64, tpu.core_type = #tpu.core_type<tc>, window_params = [{transform_indices = @transform_0, window_bounds = array<i64: 128, 128>}, {transform_indices = @transform_1, window_bounds = array<i64: 128, 128>}, {pipeline_mode = #tpu.pipeline_mode<synchronous>, transform_indices = @transform_2, window_bounds = array<i64: 1, 128>}, {transform_indices = @transform_3, window_bounds = array<i64: 128, 128>}]} {
    %c0_i32 = arith.constant 0 : i32
    %0 = arith.cmpi eq, %arg1, %c0_i32 : i32
    %1 = arith.extui %0 : i1 to i32
    %c0_i32_0 = arith.constant 0 : i32
    %2 = arith.cmpi ne, %1, %c0_i32_0 : i32
    scf.if %2 {
      %cst_10 = arith.constant 0.000000e+00 : f32
      %12 = vector.broadcast %cst_10 : f32 to vector<128x128xf32>
      %c0_11 = arith.constant 0 : index
      %c0_12 = arith.constant 0 : index
      %13 = vector.load %arg6[%c0_11, %c0_12] : memref<128x128xf32, #tpu.memory_space<vmem>>, vector<128x128xf32>
      tpu.vector_store %arg6[%c0_11, %c0_12], %12 {strides = array<i32>} : memref<128x128xf32, #tpu.memory_space<vmem>>, vector<128x128xf32>,
    } else {
    }
    %c0 = arith.constant 0 : index
    %c0_1 = arith.constant 0 : index
    %3 = vector.load %arg6[%c0, %c0_1] : memref<128x128xf32, #tpu.memory_space<vmem>>, vector<128x128xf32>
    %c0_2 = arith.constant 0 : index
    %c0_3 = arith.constant 0 : index
    %4 = vector.load %arg2[%c0_2, %c0_3] : memref<128x128xbf16, #tpu.memory_space<vmem>>, vector<128x128xbf16>
    %c0_4 = arith.constant 0 : index
    %c0_5 = arith.constant 0 : index
    %5 = vector.load %arg3[%c0_4, %c0_5] : memref<128x128xbf16, #tpu.memory_space<vmem>>, vector<128x128xbf16>
    %cst = arith.constant dense<0.000000e+00> : vector<128x128xf32>
    %6 = tpu.matmul %4, %5, %cst {dimension_numbers = #tpu.dot_dimension_numbers<[1], [0], [0], [1], [0, 0, 1, 1], [], []>} : vector<128x128xbf16>, vector<128x128xbf16>, vector<128x128xf32> -> vector<128x128xf32>
    %7 = arith.addf %3, %6 : vector<128x128xf32>
    %c0_6 = arith.constant 0 : index
    %c0_7 = arith.constant 0 : index
    %8 = vector.load %arg6[%c0_6, %c0_7] : memref<128x128xf32, #tpu.memory_space<vmem>>, vector<128x128xf32>
    tpu.vector_store %arg6[%c0_6, %c0_7], %7 {strides = array<i32>} : memref<128x128xf32, #tpu.memory_space<vmem>>, vector<128x128xf32>,
    %c0_i32_8 = arith.constant 0 : i32
    %9 = arith.cmpi eq, %arg1, %c0_i32_8 : i32
    %10 = arith.extui %9 : i1 to i32
    %c0_i32_9 = arith.constant 0 : i32
    %11 = arith.cmpi ne, %10, %c0_i32_9 : i32
    scf.if %11 {
      %c0_10 = arith.constant 0 : index
      %c0_11 = arith.constant 0 : index
      %12 = vector.load %arg6[%c0_10, %c0_11] : memref<128x128xf32, #tpu.memory_space<vmem>>, vector<128x128xf32>
      %c0_12 = arith.constant 0 : index
      %c0_13 = arith.constant 0 : index
      %13 = vector.load %arg4[%c0_12, %c0_13] : memref<1x128xf32, #tpu.memory_space<vmem>>, vector<1x128xf32>
      %14 = vector.broadcast %13 : vector<1x128xf32> to vector<128x128xf32>
      %15 = arith.addf %12, %14 : vector<128x128xf32>
      %16 = arith.truncf %15 : vector<128x128xf32> to vector<128x128xbf16>
      %c0_14 = arith.constant 0 : index
      %c0_15 = arith.constant 0 : index
      %17 = vector.load %arg5[%c0_14, %c0_15] : memref<128x128xbf16, #tpu.memory_space<vmem>>, vector<128x128xbf16>
      tpu.vector_store %arg5[%c0_14, %c0_15], %16 {strides = array<i32>} : memref<128x128xbf16, #tpu.memory_space<vmem>>, vector<128x128xbf16>,
    } else {
    }
    return
  }
  func.func @transform_0(%arg0: i32, %arg1: i32) -> (i32, i32) {
    %c0_i32 = arith.constant 0 : i32
    return %arg0, %arg1 : i32, i32
  }
  func.func @transform_1(%arg0: i32, %arg1: i32) -> (i32, i32) {
    %c0_i32 = arith.constant 0 : i32
    %c0_i32_0 = arith.constant 0 : i32
    return %arg1, %c0_i32 : i32, i32
  }
  func.func @transform_2(%arg0: i32, %arg1: i32) -> (i32, i32) {
    %c0_i32 = arith.constant 0 : i32
    %c0_i32_0 = arith.constant 0 : i32
    %c0_i32_1 = arith.constant 0 : i32
    return %c0_i32, %c0_i32_0 : i32, i32
  }
  func.func @transform_3(%arg0: i32, %arg1: i32) -> (i32, i32) {
    %c0_i32 = arith.constant 0 : i32
    %c0_i32_0 = arith.constant 0 : i32
    return %arg0, %c0_i32 : i32, i32
  }
}

module attributes {stable_mosaic.version = 11 : i64} {
  func.func @_ax_kernel(%arg0: i32, %arg1: i32, %arg2: memref<128x128xbf16, #tpu.memory_space<vmem>>, %arg3: memref<128x256xbf16, #tpu.memory_space<vmem>>, %arg4: memref<1x256xf32, #tpu.memory_space<vmem>>, %arg5: memref<128x256xbf16, #tpu.memory_space<vmem>>, %arg6: memref<128x256xf32, #tpu.memory_space<vmem>>) attributes {dimension_semantics = [#tpu.dimension_semantics<parallel>, #tpu.dimension_semantics<arbitrary>], iteration_bounds = array<i64: 1, 1>, scalar_prefetch = 0 : i64, scratch_operands = 1 : i64, tpu.core_type = #tpu.core_type<tc>, window_params = [{transform_indices = @transform_0, window_bounds = array<i64: 128, 128>}, {transform_indices = @transform_1, window_bounds = array<i64: 128, 256>}, {pipeline_mode = #tpu.pipeline_mode<synchronous>, transform_indices = @transform_2, window_bounds = array<i64: 1, 256>}, {transform_indices = @transform_3, window_bounds = array<i64: 128, 256>}]} {
    %c0_i32 = arith.constant 0 : i32
    %0 = arith.cmpi eq, %arg1, %c0_i32 : i32
    %1 = arith.extui %0 : i1 to i32
    %c0_i32_0 = arith.constant 0 : i32
    %2 = arith.cmpi ne, %1, %c0_i32_0 : i32
    scf.if %2 {
      %cst_10 = arith.constant 0.000000e+00 : f32
      %12 = vector.broadcast %cst_10 : f32 to vector<128x256xf32>
      %c0_11 = arith.constant 0 : index
      %c0_12 = arith.constant 0 : index
      %13 = vector.load %arg6[%c0_11, %c0_12] : memref<128x256xf32, #tpu.memory_space<vmem>>, vector<128x256xf32>
      tpu.vector_store %arg6[%c0_11, %c0_12], %12 {strides = array<i32>} : memref<128x256xf32, #tpu.memory_space<vmem>>, vector<128x256xf32>,
    } else {
    }
    %c0 = arith.constant 0 : index
    %c0_1 = arith.constant 0 : index
    %3 = vector.load %arg6[%c0, %c0_1] : memref<128x256xf32, #tpu.memory_space<vmem>>, vector<128x256xf32>
    %c0_2 = arith.constant 0 : index
    %c0_3 = arith.constant 0 : index
    %4 = vector.load %arg2[%c0_2, %c0_3] : memref<128x128xbf16, #tpu.memory_space<vmem>>, vector<128x128xbf16>
    %c0_4 = arith.constant 0 : index
    %c0_5 = arith.constant 0 : index
    %5 = vector.load %arg3[%c0_4, %c0_5] : memref<128x256xbf16, #tpu.memory_space<vmem>>, vector<128x256xbf16>
    %cst = arith.constant dense<0.000000e+00> : vector<128x256xf32>
    %6 = tpu.matmul %4, %5, %cst {dimension_numbers = #tpu.dot_dimension_numbers<[1], [0], [0], [1], [0, 0, 1, 1], [], []>} : vector<128x128xbf16>, vector<128x256xbf16>, vector<128x256xf32> -> vector<128x256xf32>
    %7 = arith.addf %3, %6 : vector<128x256xf32>
    %c0_6 = arith.constant 0 : index
    %c0_7 = arith.constant 0 : index
    %8 = vector.load %arg6[%c0_6, %c0_7] : memref<128x256xf32, #tpu.memory_space<vmem>>, vector<128x256xf32>
    tpu.vector_store %arg6[%c0_6, %c0_7], %7 {strides = array<i32>} : memref<128x256xf32, #tpu.memory_space<vmem>>, vector<128x256xf32>,
    %c0_i32_8 = arith.constant 0 : i32
    %9 = arith.cmpi eq, %arg1, %c0_i32_8 : i32
    %10 = arith.extui %9 : i1 to i32
    %c0_i32_9 = arith.constant 0 : i32
    %11 = arith.cmpi ne, %10, %c0_i32_9 : i32
    scf.if %11 {
      %c0_10 = arith.constant 0 : index
      %c0_11 = arith.constant 0 : index
      %12 = vector.load %arg6[%c0_10, %c0_11] : memref<128x256xf32, #tpu.memory_space<vmem>>, vector<128x256xf32>
      %c0_12 = arith.constant 0 : index
      %c0_13 = arith.constant 0 : index
      %13 = vector.load %arg4[%c0_12, %c0_13] : memref<1x256xf32, #tpu.memory_space<vmem>>, vector<1x256xf32>
      %14 = vector.broadcast %13 : vector<1x256xf32> to vector<128x256xf32>
      %15 = arith.addf %12, %14 : vector<128x256xf32>
      %16 = arith.truncf %15 : vector<128x256xf32> to vector<128x256xbf16>
      %c0_14 = arith.constant 0 : index
      %c0_15 = arith.constant 0 : index
      %17 = vector.load %arg5[%c0_14, %c0_15] : memref<128x256xbf16, #tpu.memory_space<vmem>>, vector<128x256xbf16>
      tpu.vector_store %arg5[%c0_14, %c0_15], %16 {strides = array<i32>} : memref<128x256xbf16, #tpu.memory_space<vmem>>, vector<128x256xbf16>,
    } else {
    }
    return
  }
  func.func @transform_0(%arg0: i32, %arg1: i32) -> (i32, i32) {
    %c0_i32 = arith.constant 0 : i32
    return %arg0, %arg1 : i32, i32
  }
  func.func @transform_1(%arg0: i32, %arg1: i32) -> (i32, i32) {
    %c0_i32 = arith.constant 0 : i32
    %c0_i32_0 = arith.constant 0 : i32
    return %arg1, %c0_i32 : i32, i32
  }
  func.func @transform_2(%arg0: i32, %arg1: i32) -> (i32, i32) {
    %c0_i32 = arith.constant 0 : i32
    %c0_i32_0 = arith.constant 0 : i32
    %c0_i32_1 = arith.constant 0 : i32
    return %c0_i32, %c0_i32_0 : i32, i32
  }
  func.func @transform_3(%arg0: i32, %arg1: i32) -> (i32, i32) {
    %c0_i32 = arith.constant 0 : i32
    %c0_i32_0 = arith.constant 0 : i32
    return %arg0, %c0_i32 : i32, i32
  }
}

module attributes {stable_mosaic.version = 11 : i64} {
  func.func @_xw_concat_kernel(%arg0: i32, %arg1: memref<128x128xbf16, #tpu.memory_space<vmem>>, %arg2: memref<128x128xbf16, #tpu.memory_space<vmem>>, %arg3: memref<128x128xbf16, #tpu.memory_space<vmem>>, %arg4: memref<128x128xbf16, #tpu.memory_space<vmem>>, %arg5: memref<128x128xbf16, #tpu.memory_space<vmem>>) attributes {dimension_semantics = [#tpu.dimension_semantics<parallel>], iteration_bounds = array<i64: 1>, scalar_prefetch = 0 : i64, scratch_operands = 0 : i64, tpu.core_type = #tpu.core_type<tc>, window_params = [{transform_indices = @transform_0, window_bounds = array<i64: 128, 128>}, {pipeline_mode = #tpu.pipeline_mode<synchronous>, transform_indices = @transform_1, window_bounds = array<i64: 128, 128>}, {transform_indices = @transform_2, window_bounds = array<i64: 128, 128>}, {pipeline_mode = #tpu.pipeline_mode<synchronous>, transform_indices = @transform_3, window_bounds = array<i64: 128, 128>}, {transform_indices = @transform_4, window_bounds = array<i64: 128, 128>}]} {
    %c0 = arith.constant 0 : index
    %c0_0 = arith.constant 0 : index
    %0 = vector.load %arg1[%c0, %c0_0] : memref<128x128xbf16, #tpu.memory_space<vmem>>, vector<128x128xbf16>
    %c0_1 = arith.constant 0 : index
    %c0_2 = arith.constant 0 : index
    %1 = vector.load %arg2[%c0_1, %c0_2] : memref<128x128xbf16, #tpu.memory_space<vmem>>, vector<128x128xbf16>
    %cst = arith.constant dense<0.000000e+00> : vector<128x128xf32>
    %2 = tpu.matmul %0, %1, %cst {dimension_numbers = #tpu.dot_dimension_numbers<[1], [0], [0], [1], [0, 0, 1, 1], [], []>} : vector<128x128xbf16>, vector<128x128xbf16>, vector<128x128xf32> -> vector<128x128xf32>
    %c0_3 = arith.constant 0 : index
    %c0_4 = arith.constant 0 : index
    %3 = vector.load %arg3[%c0_3, %c0_4] : memref<128x128xbf16, #tpu.memory_space<vmem>>, vector<128x128xbf16>
    %c0_5 = arith.constant 0 : index
    %c0_6 = arith.constant 0 : index
    %4 = vector.load %arg4[%c0_5, %c0_6] : memref<128x128xbf16, #tpu.memory_space<vmem>>, vector<128x128xbf16>
    %cst_7 = arith.constant dense<0.000000e+00> : vector<128x128xf32>
    %5 = tpu.matmul %3, %4, %cst_7 {dimension_numbers = #tpu.dot_dimension_numbers<[1], [0], [0], [1], [0, 0, 1, 1], [], []>} : vector<128x128xbf16>, vector<128x128xbf16>, vector<128x128xf32> -> vector<128x128xf32>
    %6 = arith.addf %2, %5 : vector<128x128xf32>
    %7 = arith.truncf %6 : vector<128x128xf32> to vector<128x128xbf16>
    %c0_8 = arith.constant 0 : index
    %c0_9 = arith.constant 0 : index
    %8 = vector.load %arg5[%c0_8, %c0_9] : memref<128x128xbf16, #tpu.memory_space<vmem>>, vector<128x128xbf16>
    tpu.vector_store %arg5[%c0_8, %c0_9], %7 {strides = array<i32>} : memref<128x128xbf16, #tpu.memory_space<vmem>>, vector<128x128xbf16>,
    return
  }
  func.func @transform_0(%arg0: i32) -> (i32, i32) {
    %c0_i32 = arith.constant 0 : i32
    %c0_i32_0 = arith.constant 0 : i32
    return %arg0, %c0_i32 : i32, i32
  }
  func.func @transform_1(%arg0: i32) -> (i32, i32) {
    %c0_i32 = arith.constant 0 : i32
    %c0_i32_0 = arith.constant 0 : i32
    %c0_i32_1 = arith.constant 0 : i32
    return %c0_i32, %c0_i32_0 : i32, i32
  }
  func.func @transform_2(%arg0: i32) -> (i32, i32) {
    %c0_i32 = arith.constant 0 : i32
    %c0_i32_0 = arith.constant 0 : i32
    return %arg0, %c0_i32 : i32, i32
  }
  func.func @transform_3(%arg0: i32) -> (i32, i32) {
    %c0_i32 = arith.constant 0 : i32
    %c0_i32_0 = arith.constant 0 : i32
    %c0_i32_1 = arith.constant 0 : i32
    return %c0_i32, %c0_i32_0 : i32, i32
  }
  func.func @transform_4(%arg0: i32) -> (i32, i32) {
    %c0_i32 = arith.constant 0 : i32
    %c0_i32_0 = arith.constant 0 : i32
    return %arg0, %c0_i32 : i32, i32
  }
}

module attributes {stable_mosaic.version = 11 : i64} {
  func.func @_ax_skip_kernel(%arg0: i32, %arg1: i32, %arg2: memref<128x128xbf16, #tpu.memory_space<vmem>>, %arg3: memref<128x128xbf16, #tpu.memory_space<vmem>>, %arg4: memref<1x128xf32, #tpu.memory_space<vmem>>, %arg5: memref<128x128xbf16, #tpu.memory_space<vmem>>, %arg6: memref<128x128xbf16, #tpu.memory_space<vmem>>, %arg7: memref<128x128xf32, #tpu.memory_space<vmem>>) attributes {dimension_semantics = [#tpu.dimension_semantics<parallel>, #tpu.dimension_semantics<arbitrary>], iteration_bounds = array<i64: 1, 1>, scalar_prefetch = 0 : i64, scratch_operands = 1 : i64, tpu.core_type = #tpu.core_type<tc>, window_params = [{transform_indices = @transform_0, window_bounds = array<i64: 128, 128>}, {transform_indices = @transform_1, window_bounds = array<i64: 128, 128>}, {pipeline_mode = #tpu.pipeline_mode<synchronous>, transform_indices = @transform_2, window_bounds = array<i64: 1, 128>}, {transform_indices = @transform_3, window_bounds = array<i64: 128, 128>}, {transform_indices = @transform_4, window_bounds = array<i64: 128, 128>}]} {
    %c0_i32 = arith.constant 0 : i32
    %0 = arith.cmpi eq, %arg1, %c0_i32 : i32
    %1 = arith.extui %0 : i1 to i32
    %c0_i32_0 = arith.constant 0 : i32
    %2 = arith.cmpi ne, %1, %c0_i32_0 : i32
    scf.if %2 {
      %cst_10 = arith.constant 0.000000e+00 : f32
      %12 = vector.broadcast %cst_10 : f32 to vector<128x128xf32>
      %c0_11 = arith.constant 0 : index
      %c0_12 = arith.constant 0 : index
      %13 = vector.load %arg7[%c0_11, %c0_12] : memref<128x128xf32, #tpu.memory_space<vmem>>, vector<128x128xf32>
      tpu.vector_store %arg7[%c0_11, %c0_12], %12 {strides = array<i32>} : memref<128x128xf32, #tpu.memory_space<vmem>>, vector<128x128xf32>,
    } else {
    }
    %c0 = arith.constant 0 : index
    %c0_1 = arith.constant 0 : index
    %3 = vector.load %arg7[%c0, %c0_1] : memref<128x128xf32, #tpu.memory_space<vmem>>, vector<128x128xf32>
    %c0_2 = arith.constant 0 : index
    %c0_3 = arith.constant 0 : index
    %4 = vector.load %arg2[%c0_2, %c0_3] : memref<128x128xbf16, #tpu.memory_space<vmem>>, vector<128x128xbf16>
    %c0_4 = arith.constant 0 : index
    %c0_5 = arith.constant 0 : index
    %5 = vector.load %arg3[%c0_4, %c0_5] : memref<128x128xbf16, #tpu.memory_space<vmem>>, vector<128x128xbf16>
    %cst = arith.constant dense<0.000000e+00> : vector<128x128xf32>
    %6 = tpu.matmul %4, %5, %cst {dimension_numbers = #tpu.dot_dimension_numbers<[1], [0], [0], [1], [0, 0, 1, 1], [], []>} : vector<128x128xbf16>, vector<128x128xbf16>, vector<128x128xf32> -> vector<128x128xf32>
    %7 = arith.addf %3, %6 : vector<128x128xf32>
    %c0_6 = arith.constant 0 : index
    %c0_7 = arith.constant 0 : index
    %8 = vector.load %arg7[%c0_6, %c0_7] : memref<128x128xf32, #tpu.memory_space<vmem>>, vector<128x128xf32>
    tpu.vector_store %arg7[%c0_6, %c0_7], %7 {strides = array<i32>} : memref<128x128xf32, #tpu.memory_space<vmem>>, vector<128x128xf32>,
    %c0_i32_8 = arith.constant 0 : i32
    %9 = arith.cmpi eq, %arg1, %c0_i32_8 : i32
    %10 = arith.extui %9 : i1 to i32
    %c0_i32_9 = arith.constant 0 : i32
    %11 = arith.cmpi ne, %10, %c0_i32_9 : i32
    scf.if %11 {
      %c0_10 = arith.constant 0 : index
      %c0_11 = arith.constant 0 : index
      %12 = vector.load %arg7[%c0_10, %c0_11] : memref<128x128xf32, #tpu.memory_space<vmem>>, vector<128x128xf32>
      %c0_12 = arith.constant 0 : index
      %c0_13 = arith.constant 0 : index
      %13 = vector.load %arg4[%c0_12, %c0_13] : memref<1x128xf32, #tpu.memory_space<vmem>>, vector<1x128xf32>
      %14 = vector.broadcast %13 : vector<1x128xf32> to vector<128x128xf32>
      %15 = arith.addf %12, %14 : vector<128x128xf32>
      %c0_14 = arith.constant 0 : index
      %c0_15 = arith.constant 0 : index
      %16 = vector.load %arg5[%c0_14, %c0_15] : memref<128x128xbf16, #tpu.memory_space<vmem>>, vector<128x128xbf16>
      %17 = arith.extf %16 : vector<128x128xbf16> to vector<128x128xf32>
      %18 = arith.addf %15, %17 : vector<128x128xf32>
      %19 = arith.truncf %18 : vector<128x128xf32> to vector<128x128xbf16>
      %c0_16 = arith.constant 0 : index
      %c0_17 = arith.constant 0 : index
      %20 = vector.load %arg6[%c0_16, %c0_17] : memref<128x128xbf16, #tpu.memory_space<vmem>>, vector<128x128xbf16>
      tpu.vector_store %arg6[%c0_16, %c0_17], %19 {strides = array<i32>} : memref<128x128xbf16, #tpu.memory_space<vmem>>, vector<128x128xbf16>,
    } else {
    }
    return
  }
  func.func @transform_0(%arg0: i32, %arg1: i32) -> (i32, i32) {
    %c0_i32 = arith.constant 0 : i32
    return %arg0, %arg1 : i32, i32
  }
  func.func @transform_1(%arg0: i32, %arg1: i32) -> (i32, i32) {
    %c0_i32 = arith.constant 0 : i32
    %c0_i32_0 = arith.constant 0 : i32
    return %arg1, %c0_i32 : i32, i32
  }
  func.func @transform_2(%arg0: i32, %arg1: i32) -> (i32, i32) {
    %c0_i32 = arith.constant 0 : i32
    %c0_i32_0 = arith.constant 0 : i32
    %c0_i32_1 = arith.constant 0 : i32
    return %c0_i32, %c0_i32_0 : i32, i32
  }
  func.func @transform_3(%arg0: i32, %arg1: i32) -> (i32, i32) {
    %c0_i32 = arith.constant 0 : i32
    %c0_i32_0 = arith.constant 0 : i32
    return %arg0, %c0_i32 : i32, i32
  }
  func.func @transform_4(%arg0: i32, %arg1: i32) -> (i32, i32) {
    %c0_i32 = arith.constant 0 : i32
    %c0_i32_0 = arith.constant 0 : i32
    return %arg0, %c0_i32 : i32, i32
  }
}

</mosaic_0001>

<llo_original>
// kernel: graph_unet_forward.14
$region0: #{graph_unet_forward.14}
  #allocation0 [shape = 'u32[]', space=smem, size = 0x4, offset = 0x4, fixed_abs, tag = 'smem constant byte address 0x4 - core index']
  #allocation1 [shape = 'u32[72,128]{1,0:T(1,128)}', space=vmem, size = 0x9000, scoped, tag = 'internal scratch']
  %s0 = inlined_call_operand.vmem [shape: bf16[128,128], index: 0, kind: input, shape index: {}]
  %s1 = inlined_call_operand.vmem [shape: bf16[128,128], index: 1, kind: input, shape index: {}]
  %s2 = inlined_call_operand.vmem [shape: bf16[128,128], index: 2, kind: output, shape index: {}]
  %s3 = sld [smem:[#allocation0]]
  $region18: #{graph_unet_forward.14} parent=0
    _
  %s5 = ssub.s32 1, %s3
  %s6 = scalar_select 0, %s5, %s3
  // Predicated region
  $region2: #{graph_unet_forward.14} parent=0 // pred_check
    _
  $region3: #{graph_unet_forward.14} parent=0 // pred_check_branch
    %8 = sbr.rel (0) target = $region5
  $region4: #{graph_unet_forward.14} parent=0 // pred_region
    _
  $region5: #{graph_unet_forward.14} parent=0 // pred_fallthru
    _
  // Predicated region
  $region6: #{graph_unet_forward.14} parent=0 // pred_check
    _
  $region7: #{graph_unet_forward.14} parent=0 // pred_check_branch
    %10 = sbr.rel (0) target = $region9
  $region8: #{graph_unet_forward.14} parent=0 // pred_region
    _
  $region9: #{graph_unet_forward.14} parent=0 // pred_fallthru
    _
  %v11 = vld [vmem:[%s0] sm:$0xf]
  %v12 = vld [vmem:[%s0 + $0x4] sm:$0xf]
  %v13 = vld [vmem:[%s0 + $0x8] sm:$0xf]
  %v14 = vld [vmem:[%s0 + $0xc] sm:$0xf]
  %v15 = vld [vmem:[%s0 + $0x10] sm:$0xf]
  %v16 = vld [vmem:[%s0 + $0x14] sm:$0xf]
  %v17 = vld [vmem:[%s0 + $0x18] sm:$0xf]
  %v18 = vld [vmem:[%s0 + $0x1c] sm:$0xf]
  %v19 = vld [vmem:[%s0 + $0x20] sm:$0xf]
  %v20 = vld [vmem:[%s0 + $0x24] sm:$0xf]
  %v21 = vld [vmem:[%s0 + $0x28] sm:$0xf]
  %v22 = vld [vmem:[%s0 + $0x2c] sm:$0xf]
  %v23 = vld [vmem:[%s0 + $0x30] sm:$0xf]
  %v24 = vld [vmem:[%s0 + $0x34] sm:$0xf]
  %v25 = vld [vmem:[%s0 + $0x38] sm:$0xf]
  %v26 = vld [vmem:[%s0 + $0x3c] sm:$0xf]
  %v27 = vld [vmem:[%s1] sm:$0xf]
  %v28 = vld [vmem:[%s1 + $0x4] sm:$0xf]
  %v29 = vld [vmem:[%s1 + $0x8] sm:$0xf]
  %v30 = vld [vmem:[%s1 + $0xc] sm:$0xf]
  %v31 = vld [vmem:[%s1 + $0x10] sm:$0xf]
  %v32 = vld [vmem:[%s1 + $0x14] sm:$0xf]
  %v33 = vld [vmem:[%s1 + $0x18] sm:$0xf]
  %v34 = vld [vmem:[%s1 + $0x1c] sm:$0xf]
  %v35 = vld [vmem:[%s1 + $0x20] sm:$0xf]
  %v36 = vld [vmem:[%s1 + $0x24] sm:$0xf]
  %v37 = vld [vmem:[%s1 + $0x28] sm:$0xf]
  %v38 = vld [vmem:[%s1 + $0x2c] sm:$0xf]
  %v39 = vld [vmem:[%s1 + $0x30] sm:$0xf]
  %v40 = vld [vmem:[%s1 + $0x34] sm:$0xf]
  %v41 = vld [vmem:[%s1 + $0x38] sm:$0xf]
  %v42 = vld [vmem:[%s1 + $0x3c] sm:$0xf]
  %v59 = vunpack.c.l.b16 %v11
  %v60 = vunpack.c.l.b16 %v12
  %v61 = vunpack.c.l.b16 %v13
  %v62 = vunpack.c.l.b16 %v14
  %v63 = vunpack.c.l.b16 %v15
  %v64 = vunpack.c.l.b16 %v16
  %v65 = vunpack.c.l.b16 %v17
  %v66 = vunpack.c.l.b16 %v18
  %v67 = vunpack.c.l.b16 %v19
  %v68 = vunpack.c.l.b16 %v20
  %v69 = vunpack.c.l.b16 %v21
  %v70 = vunpack.c.l.b16 %v22
  %v71 = vunpack.c.l.b16 %v23
  %v72 = vunpack.c.l.b16 %v24
  %v73 = vunpack.c.l.b16 %v25
  %v74 = vunpack.c.l.b16 %v26
  %v75 = vpack.c.b16 %v60, %v59
  %v76 = vpack.c.b16 %v62, %v61
  %v77 = vpack.c.b16 %v64, %v63
  %v78 = vpack.c.b16 %v66, %v65
  %v79 = vpack.c.b16 %v68, %v67
  %v80 = vpack.c.b16 %v70, %v69
  %v81 = vpack.c.b16 %v72, %v71
  %v82 = vpack.c.b16 %v74, %v73
  %v107 = vunpack.c.l.b16 %v27
  %v108 = vunpack.c.l.b16 %v28
  %v109 = vunpack.c.l.b16 %v29
  %v110 = vunpack.c.l.b16 %v30
  %v111 = vunpack.c.l.b16 %v31
  %v112 = vunpack.c.l.b16 %v32
  %v113 = vunpack.c.l.b16 %v33
  %v114 = vunpack.c.l.b16 %v34
  %v115 = vunpack.c.l.b16 %v35
  %v116 = vunpack.c.l.b16 %v36
  %v117 = vunpack.c.l.b16 %v37
  %v118 = vunpack.c.l.b16 %v38
  %v119 = vunpack.c.l.b16 %v39
  %v120 = vunpack.c.l.b16 %v40
  %v121 = vunpack.c.l.b16 %v41
  %v122 = vunpack.c.l.b16 %v42
  %v123 = vpack.c.b16 %v108, %v107
  %v124 = vpack.c.b16 %v110, %v109
  %v125 = vpack.c.b16 %v112, %v111
  %v126 = vpack.c.b16 %v114, %v113
  %v127 = vpack.c.b16 %v116, %v115
  %v128 = vpack.c.b16 %v118, %v117
  %v129 = vpack.c.b16 %v120, %v119
  %v130 = vpack.c.b16 %v122, %v121
  %139 = vmatpush.bf16.msra.mxu0 %v130
  %140 = vmatpush.bf16.msra.mxu0 %v129
  %141 = vmatpush.bf16.msra.mxu0 %v128
  %142 = vmatpush.bf16.msra.mxu0 %v127
  %143 = vmatpush.bf16.msra.mxu0 %v126
  %144 = vmatpush.bf16.msra.mxu0 %v125
  %145 = vmatpush.bf16.msra.mxu0 %v124
  %146 = vmatpush.bf16.msra.mxu0 %v123
  %147 = vmatmul.bf16.gmra.mxu0 %v75
  %v148 = vpop.f32.mrf.mxu0
  %v149 = vadd.f32 0.0, %v148
  %v150 = vpop.f32.mrf.mxu0
  %v151 = vadd.f32 0.0, %v150
  %152 = vmatmul.bf16.gmra.mxu0 %v76
  %v153 = vpop.f32.mrf.mxu0
  %v154 = vadd.f32 0.0, %v153
  %v155 = vpop.f32.mrf.mxu0
  %v156 = vadd.f32 0.0, %v155
  %157 = vmatmul.bf16.gmra.mxu0 %v77
  %v158 = vpop.f32.mrf.mxu0
  %v159 = vadd.f32 0.0, %v158
  %v160 = vpop.f32.mrf.mxu0
  %v161 = vadd.f32 0.0, %v160
  %162 = vmatmul.bf16.gmra.mxu0 %v78
  %v163 = vpop.f32.mrf.mxu0
  %v164 = vadd.f32 0.0, %v163
  %v165 = vpop.f32.mrf.mxu0
  %v166 = vadd.f32 0.0, %v165
  %167 = vmatmul.bf16.gmra.mxu0 %v79
  %v168 = vpop.f32.mrf.mxu0
  %v169 = vadd.f32 0.0, %v168
  %v170 = vpop.f32.mrf.mxu0
  %v171 = vadd.f32 0.0, %v170
  %172 = vmatmul.bf16.gmra.mxu0 %v80
  %v173 = vpop.f32.mrf.mxu0
  %v174 = vadd.f32 0.0, %v173
  %v175 = vpop.f32.mrf.mxu0
  %v176 = vadd.f32 0.0, %v175
  %177 = vmatmul.bf16.gmra.mxu0 %v81
  %v178 = vpop.f32.mrf.mxu0
  %v179 = vadd.f32 0.0, %v178
  %v180 = vpop.f32.mrf.mxu0
  %v181 = vadd.f32 0.0, %v180
  %182 = vmatmul.bf16.gmra.mxu0 %v82
  %v183 = vpop.f32.mrf.mxu0
  %v184 = vadd.f32 0.0, %v183
  %v185 = vpop.f32.mrf.mxu0
  %v186 = vadd.f32 0.0, %v185
  %187 = vdwg.mxu0
  %v188 = vpack.c.bf16 %v149, %v149
  %v189 = vpack.c.bf16 %v151, %v151
  %v190 = vpack.c.bf16 %v154, %v154
  %v191 = vpack.c.bf16 %v156, %v156
  %v192 = vpack.c.bf16 %v159, %v159
  %v193 = vpack.c.bf16 %v161, %v161
  %v194 = vpack.c.bf16 %v164, %v164
  %v195 = vpack.c.bf16 %v166, %v166
  %v196 = vpack.c.bf16 %v169, %v169
  %v197 = vpack.c.bf16 %v171, %v171
  %v198 = vpack.c.bf16 %v174, %v174
  %v199 = vpack.c.bf16 %v176, %v176
  %v200 = vpack.c.bf16 %v179, %v179
  %v201 = vpack.c.bf16 %v181, %v181
  %v202 = vpack.c.bf16 %v184, %v184
  %v203 = vpack.c.bf16 %v186, %v186
  %204 = vst [vmem:[%s2] sm:$0xf] %v188
  %205 = vst [vmem:[%s2 + $0x4] sm:$0xf] %v189
  %206 = vst [vmem:[%s2 + $0x8] sm:$0xf] %v190
  %207 = vst [vmem:[%s2 + $0xc] sm:$0xf] %v191
  %208 = vst [vmem:[%s2 + $0x10] sm:$0xf] %v192
  %209 = vst [vmem:[%s2 + $0x14] sm:$0xf] %v193
  %210 = vst [vmem:[%s2 + $0x18] sm:$0xf] %v194
  %211 = vst [vmem:[%s2 + $0x1c] sm:$0xf] %v195
  %212 = vst [vmem:[%s2 + $0x20] sm:$0xf] %v196
  %213 = vst [vmem:[%s2 + $0x24] sm:$0xf] %v197
  %214 = vst [vmem:[%s2 + $0x28] sm:$0xf] %v198
  %215 = vst [vmem:[%s2 + $0x2c] sm:$0xf] %v199
  %216 = vst [vmem:[%s2 + $0x30] sm:$0xf] %v200
  %217 = vst [vmem:[%s2 + $0x34] sm:$0xf] %v201
  %218 = vst [vmem:[%s2 + $0x38] sm:$0xf] %v202
  %219 = vst [vmem:[%s2 + $0x3c] sm:$0xf] %v203
  // Predicated region
  $region10: #{graph_unet_forward.14} parent=0 // pred_check
    _
  $region11: #{graph_unet_forward.14} parent=0 // pred_check_branch
    %221 = sbr.rel (0) target = $region13
  $region12: #{graph_unet_forward.14} parent=0 // pred_region
    _
  $region13: #{graph_unet_forward.14} parent=0 // pred_fallthru
    _
  // Predicated region
  $region14: #{graph_unet_forward.14} parent=0 // pred_check
    _
  $region15: #{graph_unet_forward.14} parent=0 // pred_check_branch
    %223 = sbr.rel (0) target = $region17
  $region16: #{graph_unet_forward.14} parent=0 // pred_region
    _
  $region17: #{graph_unet_forward.14} parent=0 // pred_fallthru
    _

// kernel: graph_unet_forward.15
$region0: #{graph_unet_forward.15}
  #allocation0 [shape = 'u32[]', space=smem, size = 0x4, offset = 0x4, fixed_abs, tag = 'smem constant byte address 0x4 - core index']
  #allocation1 [shape = 'u32[72,128]{1,0:T(1,128)}', space=vmem, size = 0x9000, scoped, tag = 'internal scratch']
  #allocation2 [shape = 'f32[128,128]{1,0:T(8,128)}', space=vmem, size = 0x10000, scoped, tag = 'scratch operand']
  %s0 = inlined_call_operand.vmem [shape: bf16[128,128], index: 0, kind: input, shape index: {}]
  %s1 = inlined_call_operand.vmem [shape: bf16[128,128], index: 1, kind: input, shape index: {}]
  %s2 = inlined_call_operand.vmem [shape: f32[1,128], index: 2, kind: input, shape index: {}]
  %s3 = inlined_call_operand.vmem [shape: bf16[128,128], index: 3, kind: output, shape index: {}]
  %s4 = sld [smem:[#allocation0]]
  $region30: #{graph_unet_forward.15} parent=0
    _
  %s6 = ssub.s32 1, %s4
  %s7 = scalar_select 0, %s6, %s4
  // Predicated region
  $region2: #{graph_unet_forward.15} parent=0 // pred_check
    _
  $region3: #{graph_unet_forward.15} parent=0 // pred_check_branch
    %9 = sbr.rel (0) target = $region5
  $region4: #{graph_unet_forward.15} parent=0 // pred_region
    _
  $region5: #{graph_unet_forward.15} parent=0 // pred_fallthru
    _
  // Predicated region
  $region6: #{graph_unet_forward.15} parent=0 // pred_check
    _
  $region7: #{graph_unet_forward.15} parent=0 // pred_check_branch
    %11 = sbr.rel (0) target = $region9
  $region8: #{graph_unet_forward.15} parent=0 // pred_region
    _
  $region9: #{graph_unet_forward.15} parent=0 // pred_fallthru
    _
  // Predicated region
  $region10: #{graph_unet_forward.15} parent=0 // pred_check
    _
  $region11: #{graph_unet_forward.15} parent=0 // pred_check_branch
    %13 = sbr.rel (0) target = $region13
  $region12: #{graph_unet_forward.15} parent=0 // pred_region
    _
  $region13: #{graph_unet_forward.15} parent=0 // pred_fallthru
    _
  %p14 = scmp.eq.s32.totalorder 0, 0
  // Predicated region
  $region14: #{graph_unet_forward.15} parent=0 // pred_check
    %p15 = pneg %p14
  $region15: #{graph_unet_forward.15} parent=0 // pred_check_branch
    %17 = sbr.rel (%p15) target = $region17
  $region16: #{graph_unet_forward.15} parent=0 // pred_region
    %18 = vst [vmem:[#allocation2] sm:$0xff] 0.0
    %19 = vst [vmem:[#allocation2 + $0x8] sm:$0xff] 0.0
    %20 = vst [vmem:[#allocation2 + $0x10] sm:$0xff] 0.0
    %21 = vst [vmem:[#allocation2 + $0x18] sm:$0xff] 0.0
    %22 = vst [vmem:[#allocation2 + $0x20] sm:$0xff] 0.0
    %23 = vst [vmem:[#allocation2 + $0x28] sm:$0xff] 0.0
    %24 = vst [vmem:[#allocation2 + $0x30] sm:$0xff] 0.0
    %25 = vst [vmem:[#allocation2 + $0x38] sm:$0xff] 0.0
    %26 = vst [vmem:[#allocation2 + $0x40] sm:$0xff] 0.0
    %27 = vst [vmem:[#allocation2 + $0x48] sm:$0xff] 0.0
    %28 = vst [vmem:[#allocation2 + $0x50] sm:$0xff] 0.0
    %29 = vst [vmem:[#allocation2 + $0x58] sm:$0xff] 0.0
    %30 = vst [vmem:[#allocation2 + $0x60] sm:$0xff] 0.0
    %31 = vst [vmem:[#allocation2 + $0x68] sm:$0xff] 0.0
    %32 = vst [vmem:[#allocation2 + $0x70] sm:$0xff] 0.0
    %33 = vst [vmem:[#allocation2 + $0x78] sm:$0xff] 0.0
  $region17: #{graph_unet_forward.15} parent=0 // pred_fallthru
    _
  %v34 = vld [vmem:[#allocation2] sm:$0xff]
  %v35 = vld [vmem:[#allocation2 + $0x8] sm:$0xff]
  %v36 = vld [vmem:[#allocation2 + $0x10] sm:$0xff]
  %v37 = vld [vmem:[#allocation2 + $0x18] sm:$0xff]
  %v38 = vld [vmem:[#allocation2 + $0x20] sm:$0xff]
  %v39 = vld [vmem:[#allocation2 + $0x28] sm:$0xff]
  %v40 = vld [vmem:[#allocation2 + $0x30] sm:$0xff]
  %v41 = vld [vmem:[#allocation2 + $0x38] sm:$0xff]
  %v42 = vld [vmem:[#allocation2 + $0x40] sm:$0xff]
  %v43 = vld [vmem:[#allocation2 + $0x48] sm:$0xff]
  %v44 = vld [vmem:[#allocation2 + $0x50] sm:$0xff]
  %v45 = vld [vmem:[#allocation2 + $0x58] sm:$0xff]
  %v46 = vld [vmem:[#allocation2 + $0x60] sm:$0xff]
  %v47 = vld [vmem:[#allocation2 + $0x68] sm:$0xff]
  %v48 = vld [vmem:[#allocation2 + $0x70] sm:$0xff]
  %v49 = vld [vmem:[#allocation2 + $0x78] sm:$0xff]
  %v50 = vld [vmem:[%s0] sm:$0xf]
  %v51 = vld [vmem:[%s0 + $0x4] sm:$0xf]
  %v52 = vld [vmem:[%s0 + $0x8] sm:$0xf]
  %v53 = vld [vmem:[%s0 + $0xc] sm:$0xf]
  %v54 = vld [vmem:[%s0 + $0x10] sm:$0xf]
  %v55 = vld [vmem:[%s0 + $0x14] sm:$0xf]
  %v56 = vld [vmem:[%s0 + $0x18] sm:$0xf]
  %v57 = vld [vmem:[%s0 + $0x1c] sm:$0xf]
  %v58 = vld [vmem:[%s0 + $0x20] sm:$0xf]
  %v59 = vld [vmem:[%s0 + $0x24] sm:$0xf]
  %v60 = vld [vmem:[%s0 + $0x28] sm:$0xf]
  %v61 = vld [vmem:[%s0 + $0x2c] sm:$0xf]
  %v62 = vld [vmem:[%s0 + $0x30] sm:$0xf]
  %v63 = vld [vmem:[%s0 + $0x34] sm:$0xf]
  %v64 = vld [vmem:[%s0 + $0x38] sm:$0xf]
  %v65 = vld [vmem:[%s0 + $0x3c] sm:$0xf]
  %v66 = vld [vmem:[%s1] sm:$0xf]
  %v67 = vld [vmem:[%s1 + $0x4] sm:$0xf]
  %v68 = vld [vmem:[%s1 + $0x8] sm:$0xf]
  %v69 = vld [vmem:[%s1 + $0xc] sm:$0xf]
  %v70 = vld [vmem:[%s1 + $0x10] sm:$0xf]
  %v71 = vld [vmem:[%s1 + $0x14] sm:$0xf]
  %v72 = vld [vmem:[%s1 + $0x18] sm:$0xf]
  %v73 = vld [vmem:[%s1 + $0x1c] sm:$0xf]
  %v74 = vld [vmem:[%s1 + $0x20] sm:$0xf]
  %v75 = vld [vmem:[%s1 + $0x24] sm:$0xf]
  %v76 = vld [vmem:[%s1 + $0x28] sm:$0xf]
  %v77 = vld [vmem:[%s1 + $0x2c] sm:$0xf]
  %v78 = vld [vmem:[%s1 + $0x30] sm:$0xf]
  %v79 = vld [vmem:[%s1 + $0x34] sm:$0xf]
  %v80 = vld [vmem:[%s1 + $0x38] sm:$0xf]
  %v81 = vld [vmem:[%s1 + $0x3c] sm:$0xf]
  %v98 = vunpack.c.l.b16 %v50
  %v99 = vunpack.c.l.b16 %v51
  %v100 = vunpack.c.l.b16 %v52
  %v101 = vunpack.c.l.b16 %v53
  %v102 = vunpack.c.l.b16 %v54
  %v103 = vunpack.c.l.b16 %v55
  %v104 = vunpack.c.l.b16 %v56
  %v105 = vunpack.c.l.b16 %v57
  %v106 = vunpack.c.l.b16 %v58
  %v107 = vunpack.c.l.b16 %v59
  %v108 = vunpack.c.l.b16 %v60
  %v109 = vunpack.c.l.b16 %v61
  %v110 = vunpack.c.l.b16 %v62
  %v111 = vunpack.c.l.b16 %v63
  %v112 = vunpack.c.l.b16 %v64
  %v113 = vunpack.c.l.b16 %v65
  %v114 = vpack.c.b16 %v99, %v98
  %v115 = vpack.c.b16 %v101, %v100
  %v116 = vpack.c.b16 %v103, %v102
  %v117 = vpack.c.b16 %v105, %v104
  %v118 = vpack.c.b16 %v107, %v106
  %v119 = vpack.c.b16 %v109, %v108
  %v120 = vpack.c.b16 %v111, %v110
  %v121 = vpack.c.b16 %v113, %v112
  %v146 = vunpack.c.l.b16 %v66
  %v147 = vunpack.c.l.b16 %v67
  %v148 = vunpack.c.l.b16 %v68
  %v149 = vunpack.c.l.b16 %v69
  %v150 = vunpack.c.l.b16 %v70
  %v151 = vunpack.c.l.b16 %v71
  %v152 = vunpack.c.l.b16 %v72
  %v153 = vunpack.c.l.b16 %v73
  %v154 = vunpack.c.l.b16 %v74
  %v155 = vunpack.c.l.b16 %v75
  %v156 = vunpack.c.l.b16 %v76
  %v157 = vunpack.c.l.b16 %v77
  %v158 = vunpack.c.l.b16 %v78
  %v159 = vunpack.c.l.b16 %v79
  %v160 = vunpack.c.l.b16 %v80
  %v161 = vunpack.c.l.b16 %v81
  %v162 = vpack.c.b16 %v147, %v146
  %v163 = vpack.c.b16 %v149, %v148
  %v164 = vpack.c.b16 %v151, %v150
  %v165 = vpack.c.b16 %v153, %v152
  %v166 = vpack.c.b16 %v155, %v154
  %v167 = vpack.c.b16 %v157, %v156
  %v168 = vpack.c.b16 %v159, %v158
  %v169 = vpack.c.b16 %v161, %v160
  %178 = vmatpush.bf16.msra.mxu0 %v169
  %179 = vmatpush.bf16.msra.mxu0 %v168
  %180 = vmatpush.bf16.msra.mxu0 %v167
  %181 = vmatpush.bf16.msra.mxu0 %v166
  %182 = vmatpush.bf16.msra.mxu0 %v165
  %183 = vmatpush.bf16.msra.mxu0 %v164
  %184 = vmatpush.bf16.msra.mxu0 %v163
  %185 = vmatpush.bf16.msra.mxu0 %v162
  %186 = vmatmul.bf16.gmra.mxu0 %v114
  %v187 = vpop.f32.mrf.mxu0
  %v188 = vadd.f32 0.0, %v187
  %v189 = vpop.f32.mrf.mxu0
  %v190 = vadd.f32 0.0, %v189
  %191 = vmatmul.bf16.gmra.mxu0 %v115
  %v192 = vpop.f32.mrf.mxu0
  %v193 = vadd.f32 0.0, %v192
  %v194 = vpop.f32.mrf.mxu0
  %v195 = vadd.f32 0.0, %v194
  %196 = vmatmul.bf16.gmra.mxu0 %v116
  %v197 = vpop.f32.mrf.mxu0
  %v198 = vadd.f32 0.0, %v197
  %v199 = vpop.f32.mrf.mxu0
  %v200 = vadd.f32 0.0, %v199
  %201 = vmatmul.bf16.gmra.mxu0 %v117
  %v202 = vpop.f32.mrf.mxu0
  %v203 = vadd.f32 0.0, %v202
  %v204 = vpop.f32.mrf.mxu0
  %v205 = vadd.f32 0.0, %v204
  %206 = vmatmul.bf16.gmra.mxu0 %v118
  %v207 = vpop.f32.mrf.mxu0
  %v208 = vadd.f32 0.0, %v207
  %v209 = vpop.f32.mrf.mxu0
  %v210 = vadd.f32 0.0, %v209
  %211 = vmatmul.bf16.gmra.mxu0 %v119
  %v212 = vpop.f32.mrf.mxu0
  %v213 = vadd.f32 0.0, %v212
  %v214 = vpop.f32.mrf.mxu0
  %v215 = vadd.f32 0.0, %v214
  %216 = vmatmul.bf16.gmra.mxu0 %v120
  %v217 = vpop.f32.mrf.mxu0
  %v218 = vadd.f32 0.0, %v217
  %v219 = vpop.f32.mrf.mxu0
  %v220 = vadd.f32 0.0, %v219
  %221 = vmatmul.bf16.gmra.mxu0 %v121
  %v222 = vpop.f32.mrf.mxu0
  %v223 = vadd.f32 0.0, %v222
  %v224 = vpop.f32.mrf.mxu0
  %v225 = vadd.f32 0.0, %v224
  %226 = vdwg.mxu0
  %v227 = vadd.f32 %v34, %v188
  %v228 = vadd.f32 %v35, %v190
  %v229 = vadd.f32 %v36, %v193
  %v230 = vadd.f32 %v37, %v195
  %v231 = vadd.f32 %v38, %v198
  %v232 = vadd.f32 %v39, %v200
  %v233 = vadd.f32 %v40, %v203
  %v234 = vadd.f32 %v41, %v205
  %v235 = vadd.f32 %v42, %v208
  %v236 = vadd.f32 %v43, %v210
  %v237 = vadd.f32 %v44, %v213
  %v238 = vadd.f32 %v45, %v215
  %v239 = vadd.f32 %v46, %v218
  %v240 = vadd.f32 %v47, %v220
  %v241 = vadd.f32 %v48, %v223
  %v242 = vadd.f32 %v49, %v225
  %243 = vst [vmem:[#allocation2] sm:$0xff] %v227
  %244 = vst [vmem:[#allocation2 + $0x8] sm:$0xff] %v228
  %245 = vst [vmem:[#allocation2 + $0x10] sm:$0xff] %v229
  %246 = vst [vmem:[#allocation2 + $0x18] sm:$0xff] %v230
  %247 = vst [vmem:[#allocation2 + $0x20] sm:$0xff] %v231
  %248 = vst [vmem:[#allocation2 + $0x28] sm:$0xff] %v232
  %249 = vst [vmem:[#allocation2 + $0x30] sm:$0xff] %v233
  %250 = vst [vmem:[#allocation2 + $0x38] sm:$0xff] %v234
  %251 = vst [vmem:[#allocation2 + $0x40] sm:$0xff] %v235
  %252 = vst [vmem:[#allocation2 + $0x48] sm:$0xff] %v236
  %253 = vst [vmem:[#allocation2 + $0x50] sm:$0xff] %v237
  %254 = vst [vmem:[#allocation2 + $0x58] sm:$0xff] %v238
  %255 = vst [vmem:[#allocation2 + $0x60] sm:$0xff] %v239
  %256 = vst [vmem:[#allocation2 + $0x68] sm:$0xff] %v240
  %257 = vst [vmem:[#allocation2 + $0x70] sm:$0xff] %v241
  %258 = vst [vmem:[#allocation2 + $0x78] sm:$0xff] %v242
  // Predicated region
  $region18: #{graph_unet_forward.15} parent=0 // pred_check
    %p259 = pneg %p14
  $region19: #{graph_unet_forward.15} parent=0 // pred_check_branch
    %261 = sbr.rel (%p259) target = $region21
  $region20: #{graph_unet_forward.15} parent=0 // pred_region
    %v262 = vld [vmem:[#allocation2] sm:$0xff]
    %v263 = vld [vmem:[#allocation2 + $0x8] sm:$0xff]
    %v264 = vld [vmem:[#allocation2 + $0x10] sm:$0xff]
    %v265 = vld [vmem:[#allocation2 + $0x18] sm:$0xff]
    %v266 = vld [vmem:[#allocation2 + $0x20] sm:$0xff]
    %v267 = vld [vmem:[#allocation2 + $0x28] sm:$0xff]
    %v268 = vld [vmem:[#allocation2 + $0x30] sm:$0xff]
    %v269 = vld [vmem:[#allocation2 + $0x38] sm:$0xff]
    %v270 = vld [vmem:[#allocation2 + $0x40] sm:$0xff]
    %v271 = vld [vmem:[#allocation2 + $0x48] sm:$0xff]
    %v272 = vld [vmem:[#allocation2 + $0x50] sm:$0xff]
    %v273 = vld [vmem:[#allocation2 + $0x58] sm:$0xff]
    %v274 = vld [vmem:[#allocation2 + $0x60] sm:$0xff]
    %v275 = vld [vmem:[#allocation2 + $0x68] sm:$0xff]
    %v276 = vld [vmem:[#allocation2 + $0x70] sm:$0xff]
    %v277 = vld [vmem:[#allocation2 + $0x78] sm:$0xff]
    %v278 = vld [vmem:[%s2] sm:$0x1]
    %v280 = vperm.slane %v278, 0
    %v282 = vadd.f32 %v262, %v280
    %v283 = vadd.f32 %v263, %v280
    %v284 = vadd.f32 %v264, %v280
    %v285 = vadd.f32 %v265, %v280
    %v286 = vadd.f32 %v266, %v280
    %v287 = vadd.f32 %v267, %v280
    %v288 = vadd.f32 %v268, %v280
    %v289 = vadd.f32 %v269, %v280
    %v290 = vadd.f32 %v270, %v280
    %v291 = vadd.f32 %v271, %v280
    %v292 = vadd.f32 %v272, %v280
    %v293 = vadd.f32 %v273, %v280
    %v294 = vadd.f32 %v274, %v280
    %v295 = vadd.f32 %v275, %v280
    %v296 = vadd.f32 %v276, %v280
    %v297 = vadd.f32 %v277, %v280
    %v298 = vpack.c.bf16 %v282, %v282
    %v299 = vpack.c.bf16 %v283, %v283
    %v300 = vpack.c.bf16 %v284, %v284
    %v301 = vpack.c.bf16 %v285, %v285
    %v302 = vpack.c.bf16 %v286, %v286
    %v303 = vpack.c.bf16 %v287, %v287
    %v304 = vpack.c.bf16 %v288, %v288
    %v305 = vpack.c.bf16 %v289, %v289
    %v306 = vpack.c.bf16 %v290, %v290
    %v307 = vpack.c.bf16 %v291, %v291
    %v308 = vpack.c.bf16 %v292, %v292
    %v309 = vpack.c.bf16 %v293, %v293
    %v310 = vpack.c.bf16 %v294, %v294
    %v311 = vpack.c.bf16 %v295, %v295
    %v312 = vpack.c.bf16 %v296, %v296
    %v313 = vpack.c.bf16 %v297, %v297
    %314 = vst [vmem:[%s3] sm:$0xf] %v298
    %315 = vst [vmem:[%s3 + $0x4] sm:$0xf] %v299
    %316 = vst [vmem:[%s3 + $0x8] sm:$0xf] %v300
    %317 = vst [vmem:[%s3 + $0xc] sm:$0xf] %v301
    %318 = vst [vmem:[%s3 + $0x10] sm:$0xf] %v302
    %319 = vst [vmem:[%s3 + $0x14] sm:$0xf] %v303
    %320 = vst [vmem:[%s3 + $0x18] sm:$0xf] %v304
    %321 = vst [vmem:[%s3 + $0x1c] sm:$0xf] %v305
    %322 = vst [vmem:[%s3 + $0x20] sm:$0xf] %v306
    %323 = vst [vmem:[%s3 + $0x24] sm:$0xf] %v307
    %324 = vst [vmem:[%s3 + $0x28] sm:$0xf] %v308
    %325 = vst [vmem:[%s3 + $0x2c] sm:$0xf] %v309
    %326 = vst [vmem:[%s3 + $0x30] sm:$0xf] %v310
    %327 = vst [vmem:[%s3 + $0x34] sm:$0xf] %v311
    %328 = vst [vmem:[%s3 + $0x38] sm:$0xf] %v312
    %329 = vst [vmem:[%s3 + $0x3c] sm:$0xf] %v313
  $region21: #{graph_unet_forward.15} parent=0 // pred_fallthru
    _
  // Predicated region
  $region22: #{graph_unet_forward.15} parent=0 // pred_check
    _
  $region23: #{graph_unet_forward.15} parent=0 // pred_check_branch
    %331 = sbr.rel (0) target = $region25
  $region24: #{graph_unet_forward.15} parent=0 // pred_region
    _
  $region25: #{graph_unet_forward.15} parent=0 // pred_fallthru
    _
  // Predicated region
  $region26: #{graph_unet_forward.15} parent=0 // pred_check
    _
  $region27: #{graph_unet_forward.15} parent=0 // pred_check_branch
    %333 = sbr.rel (0) target = $region29
  $region28: #{graph_unet_forward.15} parent=0 // pred_region
    _
  $region29: #{graph_unet_forward.15} parent=0 // pred_fallthru
    _

// kernel: graph_unet_forward.16
$region0: #{graph_unet_forward.16}
  #allocation0 [shape = 'u32[]', space=smem, size = 0x4, offset = 0x4, fixed_abs, tag = 'smem constant byte address 0x4 - core index']
  #allocation1 [shape = 'u32[72,128]{1,0:T(1,128)}', space=vmem, size = 0x9000, scoped, tag = 'internal scratch']
  %s0 = inlined_call_operand.vmem [shape: bf16[128,128], index: 0, kind: input, shape index: {}]
  %s1 = inlined_call_operand.vmem [shape: bf16[128,256], index: 1, kind: input, shape index: {}]
  %s2 = inlined_call_operand.vmem [shape: bf16[128,256], index: 2, kind: output, shape index: {}]
  %s3 = sld [smem:[#allocation0]]
  $region18: #{graph_unet_forward.16} parent=0
    _
  %s5 = ssub.s32 1, %s3
  %s6 = scalar_select 0, %s5, %s3
  // Predicated region
  $region2: #{graph_unet_forward.16} parent=0 // pred_check
    _
  $region3: #{graph_unet_forward.16} parent=0 // pred_check_branch
    %8 = sbr.rel (0) target = $region5
  $region4: #{graph_unet_forward.16} parent=0 // pred_region
    _
  $region5: #{graph_unet_forward.16} parent=0 // pred_fallthru
    _
  // Predicated region
  $region6: #{graph_unet_forward.16} parent=0 // pred_check
    _
  $region7: #{graph_unet_forward.16} parent=0 // pred_check_branch
    %10 = sbr.rel (0) target = $region9
  $region8: #{graph_unet_forward.16} parent=0 // pred_region
    _
  $region9: #{graph_unet_forward.16} parent=0 // pred_fallthru
    _
  %v11 = vld [vmem:[%s0] sm:$0xf]
  %v12 = vld [vmem:[%s0 + $0x4] sm:$0xf]
  %v13 = vld [vmem:[%s0 + $0x8] sm:$0xf]
  %v14 = vld [vmem:[%s0 + $0xc] sm:$0xf]
  %v15 = vld [vmem:[%s0 + $0x10] sm:$0xf]
  %v16 = vld [vmem:[%s0 + $0x14] sm:$0xf]
  %v17 = vld [vmem:[%s0 + $0x18] sm:$0xf]
  %v18 = vld [vmem:[%s0 + $0x1c] sm:$0xf]
  %v19 = vld [vmem:[%s0 + $0x20] sm:$0xf]
  %v20 = vld [vmem:[%s0 + $0x24] sm:$0xf]
  %v21 = vld [vmem:[%s0 + $0x28] sm:$0xf]
  %v22 = vld [vmem:[%s0 + $0x2c] sm:$0xf]
  %v23 = vld [vmem:[%s0 + $0x30] sm:$0xf]
  %v24 = vld [vmem:[%s0 + $0x34] sm:$0xf]
  %v25 = vld [vmem:[%s0 + $0x38] sm:$0xf]
  %v26 = vld [vmem:[%s0 + $0x3c] sm:$0xf]
  %v27 = vld [vmem:[%s1] sm:$0xff]
  %v28 = vld [vmem:[%s1 + $0x8] sm:$0xff]
  %v29 = vld [vmem:[%s1 + $0x10] sm:$0xff]
  %v30 = vld [vmem:[%s1 + $0x18] sm:$0xff]
  %v31 = vld [vmem:[%s1 + $0x20] sm:$0xff]
  %v32 = vld [vmem:[%s1 + $0x28] sm:$0xff]
  %v33 = vld [vmem:[%s1 + $0x30] sm:$0xff]
  %v34 = vld [vmem:[%s1 + $0x38] sm:$0xff]
  %v35 = vld [vmem:[%s1 + $0x40] sm:$0xff]
  %v36 = vld [vmem:[%s1 + $0x48] sm:$0xff]
  %v37 = vld [vmem:[%s1 + $0x50] sm:$0xff]
  %v38 = vld [vmem:[%s1 + $0x58] sm:$0xff]
  %v39 = vld [vmem:[%s1 + $0x60] sm:$0xff]
  %v40 = vld [vmem:[%s1 + $0x68] sm:$0xff]
  %v41 = vld [vmem:[%s1 + $0x70] sm:$0xff]
  %v42 = vld [vmem:[%s1 + $0x78] sm:$0xff]
  %v59 = vunpack.c.l.b16 %v11
  %v60 = vunpack.c.l.b16 %v12
  %v61 = vunpack.c.l.b16 %v13
  %v62 = vunpack.c.l.b16 %v14
  %v63 = vunpack.c.l.b16 %v15
  %v64 = vunpack.c.l.b16 %v16
  %v65 = vunpack.c.l.b16 %v17
  %v66 = vunpack.c.l.b16 %v18
  %v67 = vunpack.c.l.b16 %v19
  %v68 = vunpack.c.l.b16 %v20
  %v69 = vunpack.c.l.b16 %v21
  %v70 = vunpack.c.l.b16 %v22
  %v71 = vunpack.c.l.b16 %v23
  %v72 = vunpack.c.l.b16 %v24
  %v73 = vunpack.c.l.b16 %v25
  %v74 = vunpack.c.l.b16 %v26
  %v75 = vpack.c.b16 %v60, %v59
  %v76 = vpack.c.b16 %v62, %v61
  %v77 = vpack.c.b16 %v64, %v63
  %v78 = vpack.c.b16 %v66, %v65
  %v79 = vpack.c.b16 %v68, %v67
  %v80 = vpack.c.b16 %v70, %v69
  %v81 = vpack.c.b16 %v72, %v71
  %v82 = vpack.c.b16 %v74, %v73
  %v107 = vunpack.c.l.b16 %v27
  %v108 = vunpack.c.h.b16 %v27
  %v109 = vunpack.c.l.b16 %v28
  %v110 = vunpack.c.h.b16 %v28
  %v111 = vunpack.c.l.b16 %v29
  %v112 = vunpack.c.h.b16 %v29
  %v113 = vunpack.c.l.b16 %v30
  %v114 = vunpack.c.h.b16 %v30
  %v115 = vunpack.c.l.b16 %v31
  %v116 = vunpack.c.h.b16 %v31
  %v117 = vunpack.c.l.b16 %v32
  %v118 = vunpack.c.h.b16 %v32
  %v119 = vunpack.c.l.b16 %v33
  %v120 = vunpack.c.h.b16 %v33
  %v121 = vunpack.c.l.b16 %v34
  %v122 = vunpack.c.h.b16 %v34
  %v123 = vunpack.c.l.b16 %v35
  %v124 = vunpack.c.h.b16 %v35
  %v125 = vunpack.c.l.b16 %v36
  %v126 = vunpack.c.h.b16 %v36
  %v127 = vunpack.c.l.b16 %v37
  %v128 = vunpack.c.h.b16 %v37
  %v129 = vunpack.c.l.b16 %v38
  %v130 = vunpack.c.h.b16 %v38
  %v131 = vunpack.c.l.b16 %v39
  %v132 = vunpack.c.h.b16 %v39
  %v133 = vunpack.c.l.b16 %v40
  %v134 = vunpack.c.h.b16 %v40
  %v135 = vunpack.c.l.b16 %v41
  %v136 = vunpack.c.h.b16 %v41
  %v137 = vunpack.c.l.b16 %v42
  %v138 = vunpack.c.h.b16 %v42
  %v139 = vpack.c.b16 %v109, %v107
  %v140 = vpack.c.b16 %v110, %v108
  %v141 = vpack.c.b16 %v113, %v111
  %v142 = vpack.c.b16 %v114, %v112
  %v143 = vpack.c.b16 %v117, %v115
  %v144 = vpack.c.b16 %v118, %v116
  %v145 = vpack.c.b16 %v121, %v119
  %v146 = vpack.c.b16 %v122, %v120
  %v147 = vpack.c.b16 %v125, %v123
  %v148 = vpack.c.b16 %v126, %v124
  %v149 = vpack.c.b16 %v129, %v127
  %v150 = vpack.c.b16 %v130, %v128
  %v151 = vpack.c.b16 %v133, %v131
  %v152 = vpack.c.b16 %v134, %v132
  %v153 = vpack.c.b16 %v137, %v135
  %v154 = vpack.c.b16 %v138, %v136
  %171 = vmatpush.bf16.msra.mxu0 %v153
  %172 = vmatpush.bf16.msra.mxu0 %v151
  %173 = vmatpush.bf16.msra.mxu0 %v149
  %174 = vmatpush.bf16.msra.mxu0 %v147
  %175 = vmatpush.bf16.msra.mxu0 %v145
  %176 = vmatpush.bf16.msra.mxu0 %v143
  %177 = vmatpush.bf16.msra.mxu0 %v141
  %178 = vmatpush.bf16.msra.mxu0 %v139
  %179 = vmatmul.bf16.gmra.mxu0 %v75
  %v180 = vpop.f32.mrf.mxu0
  %v181 = vadd.f32 0.0, %v180
  %v182 = vpop.f32.mrf.mxu0
  %v183 = vadd.f32 0.0, %v182
  %184 = vmatmul.bf16.gmra.mxu0 %v76
  %v185 = vpop.f32.mrf.mxu0
  %v186 = vadd.f32 0.0, %v185
  %v187 = vpop.f32.mrf.mxu0
  %v188 = vadd.f32 0.0, %v187
  %189 = vmatmul.bf16.gmra.mxu0 %v77
  %v190 = vpop.f32.mrf.mxu0
  %v191 = vadd.f32 0.0, %v190
  %v192 = vpop.f32.mrf.mxu0
  %v193 = vadd.f32 0.0, %v192
  %194 = vmatmul.bf16.gmra.mxu0 %v78
  %v195 = vpop.f32.mrf.mxu0
  %v196 = vadd.f32 0.0, %v195
  %v197 = vpop.f32.mrf.mxu0
  %v198 = vadd.f32 0.0, %v197
  %199 = vmatmul.bf16.gmra.mxu0 %v79
  %v200 = vpop.f32.mrf.mxu0
  %v201 = vadd.f32 0.0, %v200
  %v202 = vpop.f32.mrf.mxu0
  %v203 = vadd.f32 0.0, %v202
  %204 = vmatmul.bf16.gmra.mxu0 %v80
  %v205 = vpop.f32.mrf.mxu0
  %v206 = vadd.f32 0.0, %v205
  %v207 = vpop.f32.mrf.mxu0
  %v208 = vadd.f32 0.0, %v207
  %209 = vmatmul.bf16.gmra.mxu0 %v81
  %v210 = vpop.f32.mrf.mxu0
  %v211 = vadd.f32 0.0, %v210
  %v212 = vpop.f32.mrf.mxu0
  %v213 = vadd.f32 0.0, %v212
  %214 = vmatmul.bf16.gmra.mxu0 %v82
  %v215 = vpop.f32.mrf.mxu0
  %v216 = vadd.f32 0.0, %v215
  %v217 = vpop.f32.mrf.mxu0
  %v218 = vadd.f32 0.0, %v217
  %219 = vdwg.mxu0
  %220 = vmatpush.bf16.msra.mxu0 %v154
  %221 = vmatpush.bf16.msra.mxu0 %v152
  %222 = vmatpush.bf16.msra.mxu0 %v150
  %223 = vmatpush.bf16.msra.mxu0 %v148
  %224 = vmatpush.bf16.msra.mxu0 %v146
  %225 = vmatpush.bf16.msra.mxu0 %v144
  %226 = vmatpush.bf16.msra.mxu0 %v142
  %227 = vmatpush.bf16.msra.mxu0 %v140
  %228 = vmatmul.bf16.gmra.mxu0 %v75
  %v229 = vpop.f32.mrf.mxu0
  %v230 = vadd.f32 0.0, %v229
  %v231 = vpop.f32.mrf.mxu0
  %v232 = vadd.f32 0.0, %v231
  %233 = vmatmul.bf16.gmra.mxu0 %v76
  %v234 = vpop.f32.mrf.mxu0
  %v235 = vadd.f32 0.0, %v234
  %v236 = vpop.f32.mrf.mxu0
  %v237 = vadd.f32 0.0, %v236
  %238 = vmatmul.bf16.gmra.mxu0 %v77
  %v239 = vpop.f32.mrf.mxu0
  %v240 = vadd.f32 0.0, %v239
  %v241 = vpop.f32.mrf.mxu0
  %v242 = vadd.f32 0.0, %v241
  %243 = vmatmul.bf16.gmra.mxu0 %v78
  %v244 = vpop.f32.mrf.mxu0
  %v245 = vadd.f32 0.0, %v244
  %v246 = vpop.f32.mrf.mxu0
  %v247 = vadd.f32 0.0, %v246
  %248 = vmatmul.bf16.gmra.mxu0 %v79
  %v249 = vpop.f32.mrf.mxu0
  %v250 = vadd.f32 0.0, %v249
  %v251 = vpop.f32.mrf.mxu0
  %v252 = vadd.f32 0.0, %v251
  %253 = vmatmul.bf16.gmra.mxu0 %v80
  %v254 = vpop.f32.mrf.mxu0
  %v255 = vadd.f32 0.0, %v254
  %v256 = vpop.f32.mrf.mxu0
  %v257 = vadd.f32 0.0, %v256
  %258 = vmatmul.bf16.gmra.mxu0 %v81
  %v259 = vpop.f32.mrf.mxu0
  %v260 = vadd.f32 0.0, %v259
  %v261 = vpop.f32.mrf.mxu0
  %v262 = vadd.f32 0.0, %v261
  %263 = vmatmul.bf16.gmra.mxu0 %v82
  %v264 = vpop.f32.mrf.mxu0
  %v265 = vadd.f32 0.0, %v264
  %v266 = vpop.f32.mrf.mxu0
  %v267 = vadd.f32 0.0, %v266
  %268 = vdwg.mxu0
  %v269 = vpack.c.bf16 %v230, %v181
  %v270 = vpack.c.bf16 %v232, %v183
  %v271 = vpack.c.bf16 %v235, %v186
  %v272 = vpack.c.bf16 %v237, %v188
  %v273 = vpack.c.bf16 %v240, %v191
  %v274 = vpack.c.bf16 %v242, %v193
  %v275 = vpack.c.bf16 %v245, %v196
  %v276 = vpack.c.bf16 %v247, %v198
  %v277 = vpack.c.bf16 %v250, %v201
  %v278 = vpack.c.bf16 %v252, %v203
  %v279 = vpack.c.bf16 %v255, %v206
  %v280 = vpack.c.bf16 %v257, %v208
  %v281 = vpack.c.bf16 %v260, %v211
  %v282 = vpack.c.bf16 %v262, %v213
  %v283 = vpack.c.bf16 %v265, %v216
  %v284 = vpack.c.bf16 %v267, %v218
  %285 = vst [vmem:[%s2] sm:$0xff] %v269
  %286 = vst [vmem:[%s2 + $0x8] sm:$0xff] %v270
  %287 = vst [vmem:[%s2 + $0x10] sm:$0xff] %v271
  %288 = vst [vmem:[%s2 + $0x18] sm:$0xff] %v272
  %289 = vst [vmem:[%s2 + $0x20] sm:$0xff] %v273
  %290 = vst [vmem:[%s2 + $0x28] sm:$0xff] %v274
  %291 = vst [vmem:[%s2 + $0x30] sm:$0xff] %v275
  %292 = vst [vmem:[%s2 + $0x38] sm:$0xff] %v276
  %293 = vst [vmem:[%s2 + $0x40] sm:$0xff] %v277
  %294 = vst [vmem:[%s2 + $0x48] sm:$0xff] %v278
  %295 = vst [vmem:[%s2 + $0x50] sm:$0xff] %v279
  %296 = vst [vmem:[%s2 + $0x58] sm:$0xff] %v280
  %297 = vst [vmem:[%s2 + $0x60] sm:$0xff] %v281
  %298 = vst [vmem:[%s2 + $0x68] sm:$0xff] %v282
  %299 = vst [vmem:[%s2 + $0x70] sm:$0xff] %v283
  %300 = vst [vmem:[%s2 + $0x78] sm:$0xff] %v284
  // Predicated region
  $region10: #{graph_unet_forward.16} parent=0 // pred_check
    _
  $region11: #{graph_unet_forward.16} parent=0 // pred_check_branch
    %302 = sbr.rel (0) target = $region13
  $region12: #{graph_unet_forward.16} parent=0 // pred_region
    _
  $region13: #{graph_unet_forward.16} parent=0 // pred_fallthru
    _
  // Predicated region
  $region14: #{graph_unet_forward.16} parent=0 // pred_check
    _
  $region15: #{graph_unet_forward.16} parent=0 // pred_check_branch
    %304 = sbr.rel (0) target = $region17
  $region16: #{graph_unet_forward.16} parent=0 // pred_region
    _
  $region17: #{graph_unet_forward.16} parent=0 // pred_fallthru
    _

// kernel: graph_unet_forward.17
$region0: #{graph_unet_forward.17}
  #allocation0 [shape = 'u32[]', space=smem, size = 0x4, offset = 0x4, fixed_abs, tag = 'smem constant byte address 0x4 - core index']
  #allocation1 [shape = 'u32[72,128]{1,0:T(1,128)}', space=vmem, size = 0x9000, scoped, tag = 'internal scratch']
  #allocation2 [shape = 'f32[128,256]{1,0:T(8,128)}', space=vmem, size = 0x20000, scoped, tag = 'scratch operand']
  %s0 = inlined_call_operand.vmem [shape: bf16[128,128], index: 0, kind: input, shape index: {}]
  %s1 = inlined_call_operand.vmem [shape: bf16[128,256], index: 1, kind: input, shape index: {}]
  %s2 = inlined_call_operand.vmem [shape: f32[1,256], index: 2, kind: input, shape index: {}]
  %s3 = inlined_call_operand.vmem [shape: bf16[128,256], index: 3, kind: output, shape index: {}]
  %s4 = sld [smem:[#allocation0]]
  $region30: #{graph_unet_forward.17} parent=0
    _
  %s6 = ssub.s32 1, %s4
  %s7 = scalar_select 0, %s6, %s4
  // Predicated region
  $region2: #{graph_unet_forward.17} parent=0 // pred_check
    _
  $region3: #{graph_unet_forward.17} parent=0 // pred_check_branch
    %9 = sbr.rel (0) target = $region5
  $region4: #{graph_unet_forward.17} parent=0 // pred_region
    _
  $region5: #{graph_unet_forward.17} parent=0 // pred_fallthru
    _
  // Predicated region
  $region6: #{graph_unet_forward.17} parent=0 // pred_check
    _
  $region7: #{graph_unet_forward.17} parent=0 // pred_check_branch
    %11 = sbr.rel (0) target = $region9
  $region8: #{graph_unet_forward.17} parent=0 // pred_region
    _
  $region9: #{graph_unet_forward.17} parent=0 // pred_fallthru
    _
  // Predicated region
  $region10: #{graph_unet_forward.17} parent=0 // pred_check
    _
  $region11: #{graph_unet_forward.17} parent=0 // pred_check_branch
    %13 = sbr.rel (0) target = $region13
  $region12: #{graph_unet_forward.17} parent=0 // pred_region
    _
  $region13: #{graph_unet_forward.17} parent=0 // pred_fallthru
    _
  %p14 = scmp.eq.s32.totalorder 0, 0
  // Predicated region
  $region14: #{graph_unet_forward.17} parent=0 // pred_check
    %p15 = pneg %p14
  $region15: #{graph_unet_forward.17} parent=0 // pred_check_branch
    %17 = sbr.rel (%p15) target = $region17
  $region16: #{graph_unet_forward.17} parent=0 // pred_region
    %18 = vst [vmem:[#allocation2] sm:$0xff] 0.0
    %19 = vst [vmem:[#allocation2 + $0x8] sm:$0xff] 0.0
    %20 = vst [vmem:[#allocation2 + $0x10] sm:$0xff] 0.0
    %21 = vst [vmem:[#allocation2 + $0x18] sm:$0xff] 0.0
    %22 = vst [vmem:[#allocation2 + $0x20] sm:$0xff] 0.0
    %23 = vst [vmem:[#allocation2 + $0x28] sm:$0xff] 0.0
    %24 = vst [vmem:[#allocation2 + $0x30] sm:$0xff] 0.0
    %25 = vst [vmem:[#allocation2 + $0x38] sm:$0xff] 0.0
    %26 = vst [vmem:[#allocation2 + $0x40] sm:$0xff] 0.0
    %27 = vst [vmem:[#allocation2 + $0x48] sm:$0xff] 0.0
    %28 = vst [vmem:[#allocation2 + $0x50] sm:$0xff] 0.0
    %29 = vst [vmem:[#allocation2 + $0x58] sm:$0xff] 0.0
    %30 = vst [vmem:[#allocation2 + $0x60] sm:$0xff] 0.0
    %31 = vst [vmem:[#allocation2 + $0x68] sm:$0xff] 0.0
    %32 = vst [vmem:[#allocation2 + $0x70] sm:$0xff] 0.0
    %33 = vst [vmem:[#allocation2 + $0x78] sm:$0xff] 0.0
    %34 = vst [vmem:[#allocation2 + $0x80] sm:$0xff] 0.0
    %35 = vst [vmem:[#allocation2 + $0x88] sm:$0xff] 0.0
    %36 = vst [vmem:[#allocation2 + $0x90] sm:$0xff] 0.0
    %37 = vst [vmem:[#allocation2 + $0x98] sm:$0xff] 0.0
    %38 = vst [vmem:[#allocation2 + $0xa0] sm:$0xff] 0.0
    %39 = vst [vmem:[#allocation2 + $0xa8] sm:$0xff] 0.0
    %40 = vst [vmem:[#allocation2 + $0xb0] sm:$0xff] 0.0
    %41 = vst [vmem:[#allocation2 + $0xb8] sm:$0xff] 0.0
    %42 = vst [vmem:[#allocation2 + $0xc0] sm:$0xff] 0.0
    %43 = vst [vmem:[#allocation2 + $0xc8] sm:$0xff] 0.0
    %44 = vst [vmem:[#allocation2 + $0xd0] sm:$0xff] 0.0
    %45 = vst [vmem:[#allocation2 + $0xd8] sm:$0xff] 0.0
    %46 = vst [vmem:[#allocation2 + $0xe0] sm:$0xff] 0.0
    %47 = vst [vmem:[#allocation2 + $0xe8] sm:$0xff] 0.0
    %48 = vst [vmem:[#allocation2 + $0xf0] sm:$0xff] 0.0
    %49 = vst [vmem:[#allocation2 + $0xf8] sm:$0xff] 0.0
  $region17: #{graph_unet_forward.17} parent=0 // pred_fallthru
    _
  %v50 = vld [vmem:[#allocation2] sm:$0xff]
  %v51 = vld [vmem:[#allocation2 + $0x8] sm:$0xff]
  %v52 = vld [vmem:[#allocation2 + $0x10] sm:$0xff]
  %v53 = vld [vmem:[#allocation2 + $0x18] sm:$0xff]
  %v54 = vld [vmem:[#allocation2 + $0x20] sm:$0xff]
  %v55 = vld [vmem:[#allocation2 + $0x28] sm:$0xff]
  %v56 = vld [vmem:[#allocation2 + $0x30] sm:$0xff]
  %v57 = vld [vmem:[#allocation2 + $0x38] sm:$0xff]
  %v58 = vld [vmem:[#allocation2 + $0x40] sm:$0xff]
  %v59 = vld [vmem:[#allocation2 + $0x48] sm:$0xff]
  %v60 = vld [vmem:[#allocation2 + $0x50] sm:$0xff]
  %v61 = vld [vmem:[#allocation2 + $0x58] sm:$0xff]
  %v62 = vld [vmem:[#allocation2 + $0x60] sm:$0xff]
  %v63 = vld [vmem:[#allocation2 + $0x68] sm:$0xff]
  %v64 = vld [vmem:[#allocation2 + $0x70] sm:$0xff]
  %v65 = vld [vmem:[#allocation2 + $0x78] sm:$0xff]
  %v66 = vld [vmem:[#allocation2 + $0x80] sm:$0xff]
  %v67 = vld [vmem:[#allocation2 + $0x88] sm:$0xff]
  %v68 = vld [vmem:[#allocation2 + $0x90] sm:$0xff]
  %v69 = vld [vmem:[#allocation2 + $0x98] sm:$0xff]
  %v70 = vld [vmem:[#allocation2 + $0xa0] sm:$0xff]
  %v71 = vld [vmem:[#allocation2 + $0xa8] sm:$0xff]
  %v72 = vld [vmem:[#allocation2 + $0xb0] sm:$0xff]
  %v73 = vld [vmem:[#allocation2 + $0xb8] sm:$0xff]
  %v74 = vld [vmem:[#allocation2 + $0xc0] sm:$0xff]
  %v75 = vld [vmem:[#allocation2 + $0xc8] sm:$0xff]
  %v76 = vld [vmem:[#allocation2 + $0xd0] sm:$0xff]
  %v77 = vld [vmem:[#allocation2 + $0xd8] sm:$0xff]
  %v78 = vld [vmem:[#allocation2 + $0xe0] sm:$0xff]
  %v79 = vld [vmem:[#allocation2 + $0xe8] sm:$0xff]
  %v80 = vld [vmem:[#allocation2 + $0xf0] sm:$0xff]
  %v81 = vld [vmem:[#allocation2 + $0xf8] sm:$0xff]
  %v82 = vld [vmem:[%s0] sm:$0xf]
  %v83 = vld [vmem:[%s0 + $0x4] sm:$0xf]
  %v84 = vld [vmem:[%s0 + $0x8] sm:$0xf]
  %v85 = vld [vmem:[%s0 + $0xc] sm:$0xf]
  %v86 = vld [vmem:[%s0 + $0x10] sm:$0xf]
  %v87 = vld [vmem:[%s0 + $0x14] sm:$0xf]
  %v88 = vld [vmem:[%s0 + $0x18] sm:$0xf]
  %v89 = vld [vmem:[%s0 + $0x1c] sm:$0xf]
  %v90 = vld [vmem:[%s0 + $0x20] sm:$0xf]
  %v91 = vld [vmem:[%s0 + $0x24] sm:$0xf]
  %v92 = vld [vmem:[%s0 + $0x28] sm:$0xf]
  %v93 = vld [vmem:[%s0 + $0x2c] sm:$0xf]
  %v94 = vld [vmem:[%s0 + $0x30] sm:$0xf]
  %v95 = vld [vmem:[%s0 + $0x34] sm:$0xf]
  %v96 = vld [vmem:[%s0 + $0x38] sm:$0xf]
  %v97 = vld [vmem:[%s0 + $0x3c] sm:$0xf]
  %v98 = vld [vmem:[%s1] sm:$0xff]
  %v99 = vld [vmem:[%s1 + $0x8] sm:$0xff]
  %v100 = vld [vmem:[%s1 + $0x10] sm:$0xff]
  %v101 = vld [vmem:[%s1 + $0x18] sm:$0xff]
  %v102 = vld [vmem:[%s1 + $0x20] sm:$0xff]
  %v103 = vld [vmem:[%s1 + $0x28] sm:$0xff]
  %v104 = vld [vmem:[%s1 + $0x30] sm:$0xff]
  %v105 = vld [vmem:[%s1 + $0x38] sm:$0xff]
  %v106 = vld [vmem:[%s1 + $0x40] sm:$0xff]
  %v107 = vld [vmem:[%s1 + $0x48] sm:$0xff]
  %v108 = vld [vmem:[%s1 + $0x50] sm:$0xff]
  %v109 = vld [vmem:[%s1 + $0x58] sm:$0xff]
  %v110 = vld [vmem:[%s1 + $0x60] sm:$0xff]
  %v111 = vld [vmem:[%s1 + $0x68] sm:$0xff]
  %v112 = vld [vmem:[%s1 + $0x70] sm:$0xff]
  %v113 = vld [vmem:[%s1 + $0x78] sm:$0xff]
  %v130 = vunpack.c.l.b16 %v82
  %v131 = vunpack.c.l.b16 %v83
  %v132 = vunpack.c.l.b16 %v84
  %v133 = vunpack.c.l.b16 %v85
  %v134 = vunpack.c.l.b16 %v86
  %v135 = vunpack.c.l.b16 %v87
  %v136 = vunpack.c.l.b16 %v88
  %v137 = vunpack.c.l.b16 %v89
  %v138 = vunpack.c.l.b16 %v90
  %v139 = vunpack.c.l.b16 %v91
  %v140 = vunpack.c.l.b16 %v92
  %v141 = vunpack.c.l.b16 %v93
  %v142 = vunpack.c.l.b16 %v94
  %v143 = vunpack.c.l.b16 %v95
  %v144 = vunpack.c.l.b16 %v96
  %v145 = vunpack.c.l.b16 %v97
  %v146 = vpack.c.b16 %v131, %v130
  %v147 = vpack.c.b16 %v133, %v132
  %v148 = vpack.c.b16 %v135, %v134
  %v149 = vpack.c.b16 %v137, %v136
  %v150 = vpack.c.b16 %v139, %v138
  %v151 = vpack.c.b16 %v141, %v140
  %v152 = vpack.c.b16 %v143, %v142
  %v153 = vpack.c.b16 %v145, %v144
  %v178 = vunpack.c.l.b16 %v98
  %v179 = vunpack.c.h.b16 %v98
  %v180 = vunpack.c.l.b16 %v99
  %v181 = vunpack.c.h.b16 %v99
  %v182 = vunpack.c.l.b16 %v100
  %v183 = vunpack.c.h.b16 %v100
  %v184 = vunpack.c.l.b16 %v101
  %v185 = vunpack.c.h.b16 %v101
  %v186 = vunpack.c.l.b16 %v102
  %v187 = vunpack.c.h.b16 %v102
  %v188 = vunpack.c.l.b16 %v103
  %v189 = vunpack.c.h.b16 %v103
  %v190 = vunpack.c.l.b16 %v104
  %v191 = vunpack.c.h.b16 %v104
  %v192 = vunpack.c.l.b16 %v105
  %v193 = vunpack.c.h.b16 %v105
  %v194 = vunpack.c.l.b16 %v106
  %v195 = vunpack.c.h.b16 %v106
  %v196 = vunpack.c.l.b16 %v107
  %v197 = vunpack.c.h.b16 %v107
  %v198 = vunpack.c.l.b16 %v108
  %v199 = vunpack.c.h.b16 %v108
  %v200 = vunpack.c.l.b16 %v109
  %v201 = vunpack.c.h.b16 %v109
  %v202 = vunpack.c.l.b16 %v110
  %v203 = vunpack.c.h.b16 %v110
  %v204 = vunpack.c.l.b16 %v111
  %v205 = vunpack.c.h.b16 %v111
  %v206 = vunpack.c.l.b16 %v112
  %v207 = vunpack.c.h.b16 %v112
  %v208 = vunpack.c.l.b16 %v113
  %v209 = vunpack.c.h.b16 %v113
  %v210 = vpack.c.b16 %v180, %v178
  %v211 = vpack.c.b16 %v181, %v179
  %v212 = vpack.c.b16 %v184, %v182
  %v213 = vpack.c.b16 %v185, %v183
  %v214 = vpack.c.b16 %v188, %v186
  %v215 = vpack.c.b16 %v189, %v187
  %v216 = vpack.c.b16 %v192, %v190
  %v217 = vpack.c.b16 %v193, %v191
  %v218 = vpack.c.b16 %v196, %v194
  %v219 = vpack.c.b16 %v197, %v195
  %v220 = vpack.c.b16 %v200, %v198
  %v221 = vpack.c.b16 %v201, %v199
  %v222 = vpack.c.b16 %v204, %v202
  %v223 = vpack.c.b16 %v205, %v203
  %v224 = vpack.c.b16 %v208, %v206
  %v225 = vpack.c.b16 %v209, %v207
  %242 = vmatpush.bf16.msra.mxu0 %v224
  %243 = vmatpush.bf16.msra.mxu0 %v222
  %244 = vmatpush.bf16.msra.mxu0 %v220
  %245 = vmatpush.bf16.msra.mxu0 %v218
  %246 = vmatpush.bf16.msra.mxu0 %v216
  %247 = vmatpush.bf16.msra.mxu0 %v214
  %248 = vmatpush.bf16.msra.mxu0 %v212
  %249 = vmatpush.bf16.msra.mxu0 %v210
  %250 = vmatmul.bf16.gmra.mxu0 %v146
  %v251 = vpop.f32.mrf.mxu0
  %v252 = vadd.f32 0.0, %v251
  %v253 = vpop.f32.mrf.mxu0
  %v254 = vadd.f32 0.0, %v253
  %255 = vmatmul.bf16.gmra.mxu0 %v147
  %v256 = vpop.f32.mrf.mxu0
  %v257 = vadd.f32 0.0, %v256
  %v258 = vpop.f32.mrf.mxu0
  %v259 = vadd.f32 0.0, %v258
  %260 = vmatmul.bf16.gmra.mxu0 %v148
  %v261 = vpop.f32.mrf.mxu0
  %v262 = vadd.f32 0.0, %v261
  %v263 = vpop.f32.mrf.mxu0
  %v264 = vadd.f32 0.0, %v263
  %265 = vmatmul.bf16.gmra.mxu0 %v149
  %v266 = vpop.f32.mrf.mxu0
  %v267 = vadd.f32 0.0, %v266
  %v268 = vpop.f32.mrf.mxu0
  %v269 = vadd.f32 0.0, %v268
  %270 = vmatmul.bf16.gmra.mxu0 %v150
  %v271 = vpop.f32.mrf.mxu0
  %v272 = vadd.f32 0.0, %v271
  %v273 = vpop.f32.mrf.mxu0
  %v274 = vadd.f32 0.0, %v273
  %275 = vmatmul.bf16.gmra.mxu0 %v151
  %v276 = vpop.f32.mrf.mxu0
  %v277 = vadd.f32 0.0, %v276
  %v278 = vpop.f32.mrf.mxu0
  %v279 = vadd.f32 0.0, %v278
  %280 = vmatmul.bf16.gmra.mxu0 %v152
  %v281 = vpop.f32.mrf.mxu0
  %v282 = vadd.f32 0.0, %v281
  %v283 = vpop.f32.mrf.mxu0
  %v284 = vadd.f32 0.0, %v283
  %285 = vmatmul.bf16.gmra.mxu0 %v153
  %v286 = vpop.f32.mrf.mxu0
  %v287 = vadd.f32 0.0, %v286
  %v288 = vpop.f32.mrf.mxu0
  %v289 = vadd.f32 0.0, %v288
  %290 = vdwg.mxu0
  %291 = vmatpush.bf16.msra.mxu0 %v225
  %292 = vmatpush.bf16.msra.mxu0 %v223
  %293 = vmatpush.bf16.msra.mxu0 %v221
  %294 = vmatpush.bf16.msra.mxu0 %v219
  %295 = vmatpush.bf16.msra.mxu0 %v217
  %296 = vmatpush.bf16.msra.mxu0 %v215
  %297 = vmatpush.bf16.msra.mxu0 %v213
  %298 = vmatpush.bf16.msra.mxu0 %v211
  %299 = vmatmul.bf16.gmra.mxu0 %v146
  %v300 = vpop.f32.mrf.mxu0
  %v301 = vadd.f32 0.0, %v300
  %v302 = vpop.f32.mrf.mxu0
  %v303 = vadd.f32 0.0, %v302
  %304 = vmatmul.bf16.gmra.mxu0 %v147
  %v305 = vpop.f32.mrf.mxu0
  %v306 = vadd.f32 0.0, %v305
  %v307 = vpop.f32.mrf.mxu0
  %v308 = vadd.f32 0.0, %v307
  %309 = vmatmul.bf16.gmra.mxu0 %v148
  %v310 = vpop.f32.mrf.mxu0
  %v311 = vadd.f32 0.0, %v310
  %v312 = vpop.f32.mrf.mxu0
  %v313 = vadd.f32 0.0, %v312
  %314 = vmatmul.bf16.gmra.mxu0 %v149
  %v315 = vpop.f32.mrf.mxu0
  %v316 = vadd.f32 0.0, %v315
  %v317 = vpop.f32.mrf.mxu0
  %v318 = vadd.f32 0.0, %v317
  %319 = vmatmul.bf16.gmra.mxu0 %v150
  %v320 = vpop.f32.mrf.mxu0
  %v321 = vadd.f32 0.0, %v320
  %v322 = vpop.f32.mrf.mxu0
  %v323 = vadd.f32 0.0, %v322
  %324 = vmatmul.bf16.gmra.mxu0 %v151
  %v325 = vpop.f32.mrf.mxu0
  %v326 = vadd.f32 0.0, %v325
  %v327 = vpop.f32.mrf.mxu0
  %v328 = vadd.f32 0.0, %v327
  %329 = vmatmul.bf16.gmra.mxu0 %v152
  %v330 = vpop.f32.mrf.mxu0
  %v331 = vadd.f32 0.0, %v330
  %v332 = vpop.f32.mrf.mxu0
  %v333 = vadd.f32 0.0, %v332
  %334 = vmatmul.bf16.gmra.mxu0 %v153
  %v335 = vpop.f32.mrf.mxu0
  %v336 = vadd.f32 0.0, %v335
  %v337 = vpop.f32.mrf.mxu0
  %v338 = vadd.f32 0.0, %v337
  %339 = vdwg.mxu0
  %v340 = vadd.f32 %v50, %v252
  %v341 = vadd.f32 %v51, %v301
  %v342 = vadd.f32 %v52, %v254
  %v343 = vadd.f32 %v53, %v303
  %v344 = vadd.f32 %v54, %v257
  %v345 = vadd.f32 %v55, %v306
  %v346 = vadd.f32 %v56, %v259
  %v347 = vadd.f32 %v57, %v308
  %v348 = vadd.f32 %v58, %v262
  %v349 = vadd.f32 %v59, %v311
  %v350 = vadd.f32 %v60, %v264
  %v351 = vadd.f32 %v61, %v313
  %v352 = vadd.f32 %v62, %v267
  %v353 = vadd.f32 %v63, %v316
  %v354 = vadd.f32 %v64, %v269
  %v355 = vadd.f32 %v65, %v318
  %v356 = vadd.f32 %v66, %v272
  %v357 = vadd.f32 %v67, %v321
  %v358 = vadd.f32 %v68, %v274
  %v359 = vadd.f32 %v69, %v323
  %v360 = vadd.f32 %v70, %v277
  %v361 = vadd.f32 %v71, %v326
  %v362 = vadd.f32 %v72, %v279
  %v363 = vadd.f32 %v73, %v328
  %v364 = vadd.f32 %v74, %v282
  %v365 = vadd.f32 %v75, %v331
  %v366 = vadd.f32 %v76, %v284
  %v367 = vadd.f32 %v77, %v333
  %v368 = vadd.f32 %v78, %v287
  %v369 = vadd.f32 %v79, %v336
  %v370 = vadd.f32 %v80, %v289
  %v371 = vadd.f32 %v81, %v338
  %372 = vst [vmem:[#allocation2] sm:$0xff] %v340
  %373 = vst [vmem:[#allocation2 + $0x8] sm:$0xff] %v341
  %374 = vst [vmem:[#allocation2 + $0x10] sm:$0xff] %v342
  %375 = vst [vmem:[#allocation2 + $0x18] sm:$0xff] %v343
  %376 = vst [vmem:[#allocation2 + $0x20] sm:$0xff] %v344
  %377 = vst [vmem:[#allocation2 + $0x28] sm:$0xff] %v345
  %378 = vst [vmem:[#allocation2 + $0x30] sm:$0xff] %v346
  %379 = vst [vmem:[#allocation2 + $0x38] sm:$0xff] %v347
  %380 = vst [vmem:[#allocation2 + $0x40] sm:$0xff] %v348
  %381 = vst [vmem:[#allocation2 + $0x48] sm:$0xff] %v349
  %382 = vst [vmem:[#allocation2 + $0x50] sm:$0xff] %v350
  %383 = vst [vmem:[#allocation2 + $0x58] sm:$0xff] %v351
  %384 = vst [vmem:[#allocation2 + $0x60] sm:$0xff] %v352
  %385 = vst [vmem:[#allocation2 + $0x68] sm:$0xff] %v353
  %386 = vst [vmem:[#allocation2 + $0x70] sm:$0xff] %v354
  %387 = vst [vmem:[#allocation2 + $0x78] sm:$0xff] %v355
  %388 = vst [vmem:[#allocation2 + $0x80] sm:$0xff] %v356
  %389 = vst [vmem:[#allocation2 + $0x88] sm:$0xff] %v357
  %390 = vst [vmem:[#allocation2 + $0x90] sm:$0xff] %v358
  %391 = vst [vmem:[#allocation2 + $0x98] sm:$0xff] %v359
  %392 = vst [vmem:[#allocation2 + $0xa0] sm:$0xff] %v360
  %393 = vst [vmem:[#allocation2 + $0xa8] sm:$0xff] %v361
  %394 = vst [vmem:[#allocation2 + $0xb0] sm:$0xff] %v362
  %395 = vst [vmem:[#allocation2 + $0xb8] sm:$0xff] %v363
  %396 = vst [vmem:[#allocation2 + $0xc0] sm:$0xff] %v364
  %397 = vst [vmem:[#allocation2 + $0xc8] sm:$0xff] %v365
  %398 = vst [vmem:[#allocation2 + $0xd0] sm:$0xff] %v366
  %399 = vst [vmem:[#allocation2 + $0xd8] sm:$0xff] %v367
  %400 = vst [vmem:[#allocation2 + $0xe0] sm:$0xff] %v368
  %401 = vst [vmem:[#allocation2 + $0xe8] sm:$0xff] %v369
  %402 = vst [vmem:[#allocation2 + $0xf0] sm:$0xff] %v370
  %403 = vst [vmem:[#allocation2 + $0xf8] sm:$0xff] %v371
  // Predicated region
  $region18: #{graph_unet_forward.17} parent=0 // pred_check
    %p404 = pneg %p14
  $region19: #{graph_unet_forward.17} parent=0 // pred_check_branch
    %406 = sbr.rel (%p404) target = $region21
  $region20: #{graph_unet_forward.17} parent=0 // pred_region
    %v407 = vld [vmem:[#allocation2] sm:$0xff]
    %v408 = vld [vmem:[#allocation2 + $0x8] sm:$0xff]
    %v409 = vld [vmem:[#allocation2 + $0x10] sm:$0xff]
    %v410 = vld [vmem:[#allocation2 + $0x18] sm:$0xff]
    %v411 = vld [vmem:[#allocation2 + $0x20] sm:$0xff]
    %v412 = vld [vmem:[#allocation2 + $0x28] sm:$0xff]
    %v413 = vld [vmem:[#allocation2 + $0x30] sm:$0xff]
    %v414 = vld [vmem:[#allocation2 + $0x38] sm:$0xff]
    %v415 = vld [vmem:[#allocation2 + $0x40] sm:$0xff]
    %v416 = vld [vmem:[#allocation2 + $0x48] sm:$0xff]
    %v417 = vld [vmem:[#allocation2 + $0x50] sm:$0xff]
    %v418 = vld [vmem:[#allocation2 + $0x58] sm:$0xff]
    %v419 = vld [vmem:[#allocation2 + $0x60] sm:$0xff]
    %v420 = vld [vmem:[#allocation2 + $0x68] sm:$0xff]
    %v421 = vld [vmem:[#allocation2 + $0x70] sm:$0xff]
    %v422 = vld [vmem:[#allocation2 + $0x78] sm:$0xff]
    %v423 = vld [vmem:[#allocation2 + $0x80] sm:$0xff]
    %v424 = vld [vmem:[#allocation2 + $0x88] sm:$0xff]
    %v425 = vld [vmem:[#allocation2 + $0x90] sm:$0xff]
    %v426 = vld [vmem:[#allocation2 + $0x98] sm:$0xff]
    %v427 = vld [vmem:[#allocation2 + $0xa0] sm:$0xff]
    %v428 = vld [vmem:[#allocation2 + $0xa8] sm:$0xff]
    %v429 = vld [vmem:[#allocation2 + $0xb0] sm:$0xff]
    %v430 = vld [vmem:[#allocation2 + $0xb8] sm:$0xff]
    %v431 = vld [vmem:[#allocation2 + $0xc0] sm:$0xff]
    %v432 = vld [vmem:[#allocation2 + $0xc8] sm:$0xff]
    %v433 = vld [vmem:[#allocation2 + $0xd0] sm:$0xff]
    %v434 = vld [vmem:[#allocation2 + $0xd8] sm:$0xff]
    %v435 = vld [vmem:[#allocation2 + $0xe0] sm:$0xff]
    %v436 = vld [vmem:[#allocation2 + $0xe8] sm:$0xff]
    %v437 = vld [vmem:[#allocation2 + $0xf0] sm:$0xff]
    %v438 = vld [vmem:[#allocation2 + $0xf8] sm:$0xff]
    %v439 = vld [vmem:[%s2] sm:$0x3]
    %v441 = vperm.slane %v439, 0
    %v442 = vperm.slane %v439, 1
    %v445 = vadd.f32 %v407, %v441
    %v446 = vadd.f32 %v408, %v442
    %v447 = vadd.f32 %v409, %v441
    %v448 = vadd.f32 %v410, %v442
    %v449 = vadd.f32 %v411, %v441
    %v450 = vadd.f32 %v412, %v442
    %v451 = vadd.f32 %v413, %v441
    %v452 = vadd.f32 %v414, %v442
    %v453 = vadd.f32 %v415, %v441
    %v454 = vadd.f32 %v416, %v442
    %v455 = vadd.f32 %v417, %v441
    %v456 = vadd.f32 %v418, %v442
    %v457 = vadd.f32 %v419, %v441
    %v458 = vadd.f32 %v420, %v442
    %v459 = vadd.f32 %v421, %v441
    %v460 = vadd.f32 %v422, %v442
    %v461 = vadd.f32 %v423, %v441
    %v462 = vadd.f32 %v424, %v442
    %v463 = vadd.f32 %v425, %v441
    %v464 = vadd.f32 %v426, %v442
    %v465 = vadd.f32 %v427, %v441
    %v466 = vadd.f32 %v428, %v442
    %v467 = vadd.f32 %v429, %v441
    %v468 = vadd.f32 %v430, %v442
    %v469 = vadd.f32 %v431, %v441
    %v470 = vadd.f32 %v432, %v442
    %v471 = vadd.f32 %v433, %v441
    %v472 = vadd.f32 %v434, %v442
    %v473 = vadd.f32 %v435, %v441
    %v474 = vadd.f32 %v436, %v442
    %v475 = vadd.f32 %v437, %v441
    %v476 = vadd.f32 %v438, %v442
    %v477 = vpack.c.bf16 %v446, %v445
    %v478 = vpack.c.bf16 %v448, %v447
    %v479 = vpack.c.bf16 %v450, %v449
    %v480 = vpack.c.bf16 %v452, %v451
    %v481 = vpack.c.bf16 %v454, %v453
    %v482 = vpack.c.bf16 %v456, %v455
    %v483 = vpack.c.bf16 %v458, %v457
    %v484 = vpack.c.bf16 %v460, %v459
    %v485 = vpack.c.bf16 %v462, %v461
    %v486 = vpack.c.bf16 %v464, %v463
    %v487 = vpack.c.bf16 %v466, %v465
    %v488 = vpack.c.bf16 %v468, %v467
    %v489 = vpack.c.bf16 %v470, %v469
    %v490 = vpack.c.bf16 %v472, %v471
    %v491 = vpack.c.bf16 %v474, %v473
    %v492 = vpack.c.bf16 %v476, %v475
    %493 = vst [vmem:[%s3] sm:$0xff] %v477
    %494 = vst [vmem:[%s3 + $0x8] sm:$0xff] %v478
    %495 = vst [vmem:[%s3 + $0x10] sm:$0xff] %v479
    %496 = vst [vmem:[%s3 + $0x18] sm:$0xff] %v480
    %497 = vst [vmem:[%s3 + $0x20] sm:$0xff] %v481
    %498 = vst [vmem:[%s3 + $0x28] sm:$0xff] %v482
    %499 = vst [vmem:[%s3 + $0x30] sm:$0xff] %v483
    %500 = vst [vmem:[%s3 + $0x38] sm:$0xff] %v484
    %501 = vst [vmem:[%s3 + $0x40] sm:$0xff] %v485
    %502 = vst [vmem:[%s3 + $0x48] sm:$0xff] %v486
    %503 = vst [vmem:[%s3 + $0x50] sm:$0xff] %v487
    %504 = vst [vmem:[%s3 + $0x58] sm:$0xff] %v488
    %505 = vst [vmem:[%s3 + $0x60] sm:$0xff] %v489
    %506 = vst [vmem:[%s3 + $0x68] sm:$0xff] %v490
    %507 = vst [vmem:[%s3 + $0x70] sm:$0xff] %v491
    %508 = vst [vmem:[%s3 + $0x78] sm:$0xff] %v492
  $region21: #{graph_unet_forward.17} parent=0 // pred_fallthru
    _
  // Predicated region
  $region22: #{graph_unet_forward.17} parent=0 // pred_check
    _
  $region23: #{graph_unet_forward.17} parent=0 // pred_check_branch
    %510 = sbr.rel (0) target = $region25
  $region24: #{graph_unet_forward.17} parent=0 // pred_region
    _
  $region25: #{graph_unet_forward.17} parent=0 // pred_fallthru
    _
  // Predicated region
  $region26: #{graph_unet_forward.17} parent=0 // pred_check
    _
  $region27: #{graph_unet_forward.17} parent=0 // pred_check_branch
    %512 = sbr.rel (0) target = $region29
  $region28: #{graph_unet_forward.17} parent=0 // pred_region
    _
  $region29: #{graph_unet_forward.17} parent=0 // pred_fallthru
    _

// kernel: graph_unet_forward.26
$region0: #{graph_unet_forward.26}
  #allocation0 [shape = 'u32[]', space=smem, size = 0x4, offset = 0x4, fixed_abs, tag = 'smem constant byte address 0x4 - core index']
  #allocation1 [shape = 'u32[72,128]{1,0:T(1,128)}', space=vmem, size = 0x9000, scoped, tag = 'internal scratch']
  %s0 = inlined_call_operand.vmem [shape: bf16[128,128], index: 0, kind: input, shape index: {}]
  %s1 = inlined_call_operand.vmem [shape: bf16[128,128], index: 1, kind: input, shape index: {}]
  %s2 = inlined_call_operand.vmem [shape: bf16[128,128], index: 2, kind: input, shape index: {}]
  %s3 = inlined_call_operand.vmem [shape: bf16[128,128], index: 3, kind: input, shape index: {}]
  %s4 = inlined_call_operand.vmem [shape: bf16[128,128], index: 4, kind: output, shape index: {}]
  %s5 = sld [smem:[#allocation0]]
  $region26: #{graph_unet_forward.26} parent=0
    _
  %s7 = ssub.s32 1, %s5
  %s8 = scalar_select 0, %s7, %s5
  // Predicated region
  $region2: #{graph_unet_forward.26} parent=0 // pred_check
    _
  $region3: #{graph_unet_forward.26} parent=0 // pred_check_branch
    %10 = sbr.rel (0) target = $region5
  $region4: #{graph_unet_forward.26} parent=0 // pred_region
    _
  $region5: #{graph_unet_forward.26} parent=0 // pred_fallthru
    _
  // Predicated region
  $region6: #{graph_unet_forward.26} parent=0 // pred_check
    _
  $region7: #{graph_unet_forward.26} parent=0 // pred_check_branch
    %12 = sbr.rel (0) target = $region9
  $region8: #{graph_unet_forward.26} parent=0 // pred_region
    _
  $region9: #{graph_unet_forward.26} parent=0 // pred_fallthru
    _
  // Predicated region
  $region10: #{graph_unet_forward.26} parent=0 // pred_check
    _
  $region11: #{graph_unet_forward.26} parent=0 // pred_check_branch
    %14 = sbr.rel (0) target = $region13
  $region12: #{graph_unet_forward.26} parent=0 // pred_region
    _
  $region13: #{graph_unet_forward.26} parent=0 // pred_fallthru
    _
  // Predicated region
  $region14: #{graph_unet_forward.26} parent=0 // pred_check
    _
  $region15: #{graph_unet_forward.26} parent=0 // pred_check_branch
    %16 = sbr.rel (0) target = $region17
  $region16: #{graph_unet_forward.26} parent=0 // pred_region
    _
  $region17: #{graph_unet_forward.26} parent=0 // pred_fallthru
    _
  %v17 = vld [vmem:[%s0] sm:$0xf]
  %v18 = vld [vmem:[%s0 + $0x4] sm:$0xf]
  %v19 = vld [vmem:[%s0 + $0x8] sm:$0xf]
  %v20 = vld [vmem:[%s0 + $0xc] sm:$0xf]
  %v21 = vld [vmem:[%s0 + $0x10] sm:$0xf]
  %v22 = vld [vmem:[%s0 + $0x14] sm:$0xf]
  %v23 = vld [vmem:[%s0 + $0x18] sm:$0xf]
  %v24 = vld [vmem:[%s0 + $0x1c] sm:$0xf]
  %v25 = vld [vmem:[%s0 + $0x20] sm:$0xf]
  %v26 = vld [vmem:[%s0 + $0x24] sm:$0xf]
  %v27 = vld [vmem:[%s0 + $0x28] sm:$0xf]
  %v28 = vld [vmem:[%s0 + $0x2c] sm:$0xf]
  %v29 = vld [vmem:[%s0 + $0x30] sm:$0xf]
  %v30 = vld [vmem:[%s0 + $0x34] sm:$0xf]
  %v31 = vld [vmem:[%s0 + $0x38] sm:$0xf]
  %v32 = vld [vmem:[%s0 + $0x3c] sm:$0xf]
  %v33 = vld [vmem:[%s1] sm:$0xf]
  %v34 = vld [vmem:[%s1 + $0x4] sm:$0xf]
  %v35 = vld [vmem:[%s1 + $0x8] sm:$0xf]
  %v36 = vld [vmem:[%s1 + $0xc] sm:$0xf]
  %v37 = vld [vmem:[%s1 + $0x10] sm:$0xf]
  %v38 = vld [vmem:[%s1 + $0x14] sm:$0xf]
  %v39 = vld [vmem:[%s1 + $0x18] sm:$0xf]
  %v40 = vld [vmem:[%s1 + $0x1c] sm:$0xf]
  %v41 = vld [vmem:[%s1 + $0x20] sm:$0xf]
  %v42 = vld [vmem:[%s1 + $0x24] sm:$0xf]
  %v43 = vld [vmem:[%s1 + $0x28] sm:$0xf]
  %v44 = vld [vmem:[%s1 + $0x2c] sm:$0xf]
  %v45 = vld [vmem:[%s1 + $0x30] sm:$0xf]
  %v46 = vld [vmem:[%s1 + $0x34] sm:$0xf]
  %v47 = vld [vmem:[%s1 + $0x38] sm:$0xf]
  %v48 = vld [vmem:[%s1 + $0x3c] sm:$0xf]
  %v49 = vld [vmem:[%s2] sm:$0xf]
  %v50 = vld [vmem:[%s2 + $0x4] sm:$0xf]
  %v51 = vld [vmem:[%s2 + $0x8] sm:$0xf]
  %v52 = vld [vmem:[%s2 + $0xc] sm:$0xf]
  %v53 = vld [vmem:[%s2 + $0x10] sm:$0xf]
  %v54 = vld [vmem:[%s2 + $0x14] sm:$0xf]
  %v55 = vld [vmem:[%s2 + $0x18] sm:$0xf]
  %v56 = vld [vmem:[%s2 + $0x1c] sm:$0xf]
  %v57 = vld [vmem:[%s2 + $0x20] sm:$0xf]
  %v58 = vld [vmem:[%s2 + $0x24] sm:$0xf]
  %v59 = vld [vmem:[%s2 + $0x28] sm:$0xf]
  %v60 = vld [vmem:[%s2 + $0x2c] sm:$0xf]
  %v61 = vld [vmem:[%s2 + $0x30] sm:$0xf]
  %v62 = vld [vmem:[%s2 + $0x34] sm:$0xf]
  %v63 = vld [vmem:[%s2 + $0x38] sm:$0xf]
  %v64 = vld [vmem:[%s2 + $0x3c] sm:$0xf]
  %v65 = vld [vmem:[%s3] sm:$0xf]
  %v66 = vld [vmem:[%s3 + $0x4] sm:$0xf]
  %v67 = vld [vmem:[%s3 + $0x8] sm:$0xf]
  %v68 = vld [vmem:[%s3 + $0xc] sm:$0xf]
  %v69 = vld [vmem:[%s3 + $0x10] sm:$0xf]
  %v70 = vld [vmem:[%s3 + $0x14] sm:$0xf]
  %v71 = vld [vmem:[%s3 + $0x18] sm:$0xf]
  %v72 = vld [vmem:[%s3 + $0x1c] sm:$0xf]
  %v73 = vld [vmem:[%s3 + $0x20] sm:$0xf]
  %v74 = vld [vmem:[%s3 + $0x24] sm:$0xf]
  %v75 = vld [vmem:[%s3 + $0x28] sm:$0xf]
  %v76 = vld [vmem:[%s3 + $0x2c] sm:$0xf]
  %v77 = vld [vmem:[%s3 + $0x30] sm:$0xf]
  %v78 = vld [vmem:[%s3 + $0x34] sm:$0xf]
  %v79 = vld [vmem:[%s3 + $0x38] sm:$0xf]
  %v80 = vld [vmem:[%s3 + $0x3c] sm:$0xf]
  %v97 = vunpack.c.l.b16 %v49
  %v98 = vunpack.c.l.b16 %v50
  %v99 = vunpack.c.l.b16 %v51
  %v100 = vunpack.c.l.b16 %v52
  %v101 = vunpack.c.l.b16 %v53
  %v102 = vunpack.c.l.b16 %v54
  %v103 = vunpack.c.l.b16 %v55
  %v104 = vunpack.c.l.b16 %v56
  %v105 = vunpack.c.l.b16 %v57
  %v106 = vunpack.c.l.b16 %v58
  %v107 = vunpack.c.l.b16 %v59
  %v108 = vunpack.c.l.b16 %v60
  %v109 = vunpack.c.l.b16 %v61
  %v110 = vunpack.c.l.b16 %v62
  %v111 = vunpack.c.l.b16 %v63
  %v112 = vunpack.c.l.b16 %v64
  %v113 = vpack.c.b16 %v98, %v97
  %v114 = vpack.c.b16 %v100, %v99
  %v115 = vpack.c.b16 %v102, %v101
  %v116 = vpack.c.b16 %v104, %v103
  %v117 = vpack.c.b16 %v106, %v105
  %v118 = vpack.c.b16 %v108, %v107
  %v119 = vpack.c.b16 %v110, %v109
  %v120 = vpack.c.b16 %v112, %v111
  %v145 = vunpack.c.l.b16 %v65
  %v146 = vunpack.c.l.b16 %v66
  %v147 = vunpack.c.l.b16 %v67
  %v148 = vunpack.c.l.b16 %v68
  %v149 = vunpack.c.l.b16 %v69
  %v150 = vunpack.c.l.b16 %v70
  %v151 = vunpack.c.l.b16 %v71
  %v152 = vunpack.c.l.b16 %v72
  %v153 = vunpack.c.l.b16 %v73
  %v154 = vunpack.c.l.b16 %v74
  %v155 = vunpack.c.l.b16 %v75
  %v156 = vunpack.c.l.b16 %v76
  %v157 = vunpack.c.l.b16 %v77
  %v158 = vunpack.c.l.b16 %v78
  %v159 = vunpack.c.l.b16 %v79
  %v160 = vunpack.c.l.b16 %v80
  %v161 = vpack.c.b16 %v146, %v145
  %v162 = vpack.c.b16 %v148, %v147
  %v163 = vpack.c.b16 %v150, %v149
  %v164 = vpack.c.b16 %v152, %v151
  %v165 = vpack.c.b16 %v154, %v153
  %v166 = vpack.c.b16 %v156, %v155
  %v167 = vpack.c.b16 %v158, %v157
  %v168 = vpack.c.b16 %v160, %v159
  %177 = vmatpush.bf16.msra.mxu0 %v168
  %178 = vmatpush.bf16.msra.mxu0 %v167
  %179 = vmatpush.bf16.msra.mxu0 %v166
  %180 = vmatpush.bf16.msra.mxu0 %v165
  %181 = vmatpush.bf16.msra.mxu0 %v164
  %182 = vmatpush.bf16.msra.mxu0 %v163
  %183 = vmatpush.bf16.msra.mxu0 %v162
  %184 = vmatpush.bf16.msra.mxu0 %v161
  %185 = vmatmul.bf16.gmra.mxu0 %v113
  %v186 = vpop.f32.mrf.mxu0
  %v187 = vadd.f32 0.0, %v186
  %v188 = vpop.f32.mrf.mxu0
  %v189 = vadd.f32 0.0, %v188
  %190 = vmatmul.bf16.gmra.mxu0 %v114
  %v191 = vpop.f32.mrf.mxu0
  %v192 = vadd.f32 0.0, %v191
  %v193 = vpop.f32.mrf.mxu0
  %v194 = vadd.f32 0.0, %v193
  %195 = vmatmul.bf16.gmra.mxu0 %v115
  %v196 = vpop.f32.mrf.mxu0
  %v197 = vadd.f32 0.0, %v196
  %v198 = vpop.f32.mrf.mxu0
  %v199 = vadd.f32 0.0, %v198
  %200 = vmatmul.bf16.gmra.mxu0 %v116
  %v201 = vpop.f32.mrf.mxu0
  %v202 = vadd.f32 0.0, %v201
  %v203 = vpop.f32.mrf.mxu0
  %v204 = vadd.f32 0.0, %v203
  %205 = vmatmul.bf16.gmra.mxu0 %v117
  %v206 = vpop.f32.mrf.mxu0
  %v207 = vadd.f32 0.0, %v206
  %v208 = vpop.f32.mrf.mxu0
  %v209 = vadd.f32 0.0, %v208
  %210 = vmatmul.bf16.gmra.mxu0 %v118
  %v211 = vpop.f32.mrf.mxu0
  %v212 = vadd.f32 0.0, %v211
  %v213 = vpop.f32.mrf.mxu0
  %v214 = vadd.f32 0.0, %v213
  %215 = vmatmul.bf16.gmra.mxu0 %v119
  %v216 = vpop.f32.mrf.mxu0
  %v217 = vadd.f32 0.0, %v216
  %v218 = vpop.f32.mrf.mxu0
  %v219 = vadd.f32 0.0, %v218
  %220 = vmatmul.bf16.gmra.mxu0 %v120
  %v221 = vpop.f32.mrf.mxu0
  %v222 = vadd.f32 0.0, %v221
  %v223 = vpop.f32.mrf.mxu0
  %v224 = vadd.f32 0.0, %v223
  %225 = vdwg.mxu0
  %v242 = vunpack.c.l.b16 %v17
  %v243 = vunpack.c.l.b16 %v18
  %v244 = vunpack.c.l.b16 %v19
  %v245 = vunpack.c.l.b16 %v20
  %v246 = vunpack.c.l.b16 %v21
  %v247 = vunpack.c.l.b16 %v22
  %v248 = vunpack.c.l.b16 %v23
  %v249 = vunpack.c.l.b16 %v24
  %v250 = vunpack.c.l.b16 %v25
  %v251 = vunpack.c.l.b16 %v26
  %v252 = vunpack.c.l.b16 %v27
  %v253 = vunpack.c.l.b16 %v28
  %v254 = vunpack.c.l.b16 %v29
  %v255 = vunpack.c.l.b16 %v30
  %v256 = vunpack.c.l.b16 %v31
  %v257 = vunpack.c.l.b16 %v32
  %v258 = vpack.c.b16 %v243, %v242
  %v259 = vpack.c.b16 %v245, %v244
  %v260 = vpack.c.b16 %v247, %v246
  %v261 = vpack.c.b16 %v249, %v248
  %v262 = vpack.c.b16 %v251, %v250
  %v263 = vpack.c.b16 %v253, %v252
  %v264 = vpack.c.b16 %v255, %v254
  %v265 = vpack.c.b16 %v257, %v256
  %v290 = vunpack.c.l.b16 %v33
  %v291 = vunpack.c.l.b16 %v34
  %v292 = vunpack.c.l.b16 %v35
  %v293 = vunpack.c.l.b16 %v36
  %v294 = vunpack.c.l.b16 %v37
  %v295 = vunpack.c.l.b16 %v38
  %v296 = vunpack.c.l.b16 %v39
  %v297 = vunpack.c.l.b16 %v40
  %v298 = vunpack.c.l.b16 %v41
  %v299 = vunpack.c.l.b16 %v42
  %v300 = vunpack.c.l.b16 %v43
  %v301 = vunpack.c.l.b16 %v44
  %v302 = vunpack.c.l.b16 %v45
  %v303 = vunpack.c.l.b16 %v46
  %v304 = vunpack.c.l.b16 %v47
  %v305 = vunpack.c.l.b16 %v48
  %v306 = vpack.c.b16 %v291, %v290
  %v307 = vpack.c.b16 %v293, %v292
  %v308 = vpack.c.b16 %v295, %v294
  %v309 = vpack.c.b16 %v297, %v296
  %v310 = vpack.c.b16 %v299, %v298
  %v311 = vpack.c.b16 %v301, %v300
  %v312 = vpack.c.b16 %v303, %v302
  %v313 = vpack.c.b16 %v305, %v304
  %322 = vmatpush.bf16.msra.mxu0 %v313
  %323 = vmatpush.bf16.msra.mxu0 %v312
  %324 = vmatpush.bf16.msra.mxu0 %v311
  %325 = vmatpush.bf16.msra.mxu0 %v310
  %326 = vmatpush.bf16.msra.mxu0 %v309
  %327 = vmatpush.bf16.msra.mxu0 %v308
  %328 = vmatpush.bf16.msra.mxu0 %v307
  %329 = vmatpush.bf16.msra.mxu0 %v306
  %330 = vmatmul.bf16.gmra.mxu0 %v258
  %v331 = vpop.f32.mrf.mxu0
  %v332 = vadd.f32 %v187, %v331
  %v333 = vpop.f32.mrf.mxu0
  %v334 = vadd.f32 %v189, %v333
  %335 = vmatmul.bf16.gmra.mxu0 %v259
  %v336 = vpop.f32.mrf.mxu0
  %v337 = vadd.f32 %v192, %v336
  %v338 = vpop.f32.mrf.mxu0
  %v339 = vadd.f32 %v194, %v338
  %340 = vmatmul.bf16.gmra.mxu0 %v260
  %v341 = vpop.f32.mrf.mxu0
  %v342 = vadd.f32 %v197, %v341
  %v343 = vpop.f32.mrf.mxu0
  %v344 = vadd.f32 %v199, %v343
  %345 = vmatmul.bf16.gmra.mxu0 %v261
  %v346 = vpop.f32.mrf.mxu0
  %v347 = vadd.f32 %v202, %v346
  %v348 = vpop.f32.mrf.mxu0
  %v349 = vadd.f32 %v204, %v348
  %350 = vmatmul.bf16.gmra.mxu0 %v262
  %v351 = vpop.f32.mrf.mxu0
  %v352 = vadd.f32 %v207, %v351
  %v353 = vpop.f32.mrf.mxu0
  %v354 = vadd.f32 %v209, %v353
  %355 = vmatmul.bf16.gmra.mxu0 %v263
  %v356 = vpop.f32.mrf.mxu0
  %v357 = vadd.f32 %v212, %v356
  %v358 = vpop.f32.mrf.mxu0
  %v359 = vadd.f32 %v214, %v358
  %360 = vmatmul.bf16.gmra.mxu0 %v264
  %v361 = vpop.f32.mrf.mxu0
  %v362 = vadd.f32 %v217, %v361
  %v363 = vpop.f32.mrf.mxu0
  %v364 = vadd.f32 %v219, %v363
  %365 = vmatmul.bf16.gmra.mxu0 %v265
  %v366 = vpop.f32.mrf.mxu0
  %v367 = vadd.f32 %v222, %v366
  %v368 = vpop.f32.mrf.mxu0
  %v369 = vadd.f32 %v224, %v368
  %370 = vdwg.mxu0
  %v371 = vpack.c.bf16 %v332, %v332
  %v372 = vpack.c.bf16 %v334, %v334
  %v373 = vpack.c.bf16 %v337, %v337
  %v374 = vpack.c.bf16 %v339, %v339
  %v375 = vpack.c.bf16 %v342, %v342
  %v376 = vpack.c.bf16 %v344, %v344
  %v377 = vpack.c.bf16 %v347, %v347
  %v378 = vpack.c.bf16 %v349, %v349
  %v379 = vpack.c.bf16 %v352, %v352
  %v380 = vpack.c.bf16 %v354, %v354
  %v381 = vpack.c.bf16 %v357, %v357
  %v382 = vpack.c.bf16 %v359, %v359
  %v383 = vpack.c.bf16 %v362, %v362
  %v384 = vpack.c.bf16 %v364, %v364
  %v385 = vpack.c.bf16 %v367, %v367
  %v386 = vpack.c.bf16 %v369, %v369
  %387 = vst [vmem:[%s4] sm:$0xf] %v371
  %388 = vst [vmem:[%s4 + $0x4] sm:$0xf] %v372
  %389 = vst [vmem:[%s4 + $0x8] sm:$0xf] %v373
  %390 = vst [vmem:[%s4 + $0xc] sm:$0xf] %v374
  %391 = vst [vmem:[%s4 + $0x10] sm:$0xf] %v375
  %392 = vst [vmem:[%s4 + $0x14] sm:$0xf] %v376
  %393 = vst [vmem:[%s4 + $0x18] sm:$0xf] %v377
  %394 = vst [vmem:[%s4 + $0x1c] sm:$0xf] %v378
  %395 = vst [vmem:[%s4 + $0x20] sm:$0xf] %v379
  %396 = vst [vmem:[%s4 + $0x24] sm:$0xf] %v380
  %397 = vst [vmem:[%s4 + $0x28] sm:$0xf] %v381
  %398 = vst [vmem:[%s4 + $0x2c] sm:$0xf] %v382
  %399 = vst [vmem:[%s4 + $0x30] sm:$0xf] %v383
  %400 = vst [vmem:[%s4 + $0x34] sm:$0xf] %v384
  %401 = vst [vmem:[%s4 + $0x38] sm:$0xf] %v385
  %402 = vst [vmem:[%s4 + $0x3c] sm:$0xf] %v386
  // Predicated region
  $region18: #{graph_unet_forward.26} parent=0 // pred_check
    _
  $region19: #{graph_unet_forward.26} parent=0 // pred_check_branch
    %404 = sbr.rel (0) target = $region21
  $region20: #{graph_unet_forward.26} parent=0 // pred_region
    _
  $region21: #{graph_unet_forward.26} parent=0 // pred_fallthru
    _
  // Predicated region
  $region22: #{graph_unet_forward.26} parent=0 // pred_check
    _
  $region23: #{graph_unet_forward.26} parent=0 // pred_check_branch
    %406 = sbr.rel (0) target = $region25
  $region24: #{graph_unet_forward.26} parent=0 // pred_region
    _
  $region25: #{graph_unet_forward.26} parent=0 // pred_fallthru
    _

// kernel: graph_unet_forward.23
$region0: #{graph_unet_forward.23}
  #allocation0 [shape = 'u32[]', space=smem, size = 0x4, offset = 0x4, fixed_abs, tag = 'smem constant byte address 0x4 - core index']
  #allocation1 [shape = 'u32[72,128]{1,0:T(1,128)}', space=vmem, size = 0x9000, scoped, tag = 'internal scratch']
  #allocation2 [shape = 'f32[128,128]{1,0:T(8,128)}', space=vmem, size = 0x10000, scoped, tag = 'scratch operand']
  %s0 = inlined_call_operand.vmem [shape: bf16[128,128], index: 0, kind: input, shape index: {}]
  %s1 = inlined_call_operand.vmem [shape: bf16[128,128], index: 1, kind: input, shape index: {}]
  %s2 = inlined_call_operand.vmem [shape: f32[1,128], index: 2, kind: input, shape index: {}]
  %s3 = inlined_call_operand.vmem [shape: bf16[128,128], index: 3, kind: input, shape index: {}]
  %s4 = inlined_call_operand.vmem [shape: bf16[128,128], index: 4, kind: output, shape index: {}]
  %s5 = sld [smem:[#allocation0]]
  $region34: #{graph_unet_forward.23} parent=0
    _
  %s7 = ssub.s32 1, %s5
  %s8 = scalar_select 0, %s7, %s5
  // Predicated region
  $region2: #{graph_unet_forward.23} parent=0 // pred_check
    _
  $region3: #{graph_unet_forward.23} parent=0 // pred_check_branch
    %10 = sbr.rel (0) target = $region5
  $region4: #{graph_unet_forward.23} parent=0 // pred_region
    _
  $region5: #{graph_unet_forward.23} parent=0 // pred_fallthru
    _
  // Predicated region
  $region6: #{graph_unet_forward.23} parent=0 // pred_check
    _
  $region7: #{graph_unet_forward.23} parent=0 // pred_check_branch
    %12 = sbr.rel (0) target = $region9
  $region8: #{graph_unet_forward.23} parent=0 // pred_region
    _
  $region9: #{graph_unet_forward.23} parent=0 // pred_fallthru
    _
  // Predicated region
  $region10: #{graph_unet_forward.23} parent=0 // pred_check
    _
  $region11: #{graph_unet_forward.23} parent=0 // pred_check_branch
    %14 = sbr.rel (0) target = $region13
  $region12: #{graph_unet_forward.23} parent=0 // pred_region
    _
  $region13: #{graph_unet_forward.23} parent=0 // pred_fallthru
    _
  // Predicated region
  $region14: #{graph_unet_forward.23} parent=0 // pred_check
    _
  $region15: #{graph_unet_forward.23} parent=0 // pred_check_branch
    %16 = sbr.rel (0) target = $region17
  $region16: #{graph_unet_forward.23} parent=0 // pred_region
    _
  $region17: #{graph_unet_forward.23} parent=0 // pred_fallthru
    _
  %p17 = scmp.eq.s32.totalorder 0, 0
  // Predicated region
  $region18: #{graph_unet_forward.23} parent=0 // pred_check
    %p18 = pneg %p17
  $region19: #{graph_unet_forward.23} parent=0 // pred_check_branch
    %20 = sbr.rel (%p18) target = $region21
  $region20: #{graph_unet_forward.23} parent=0 // pred_region
    %21 = vst [vmem:[#allocation2] sm:$0xff] 0.0
    %22 = vst [vmem:[#allocation2 + $0x8] sm:$0xff] 0.0
    %23 = vst [vmem:[#allocation2 + $0x10] sm:$0xff] 0.0
    %24 = vst [vmem:[#allocation2 + $0x18] sm:$0xff] 0.0
    %25 = vst [vmem:[#allocation2 + $0x20] sm:$0xff] 0.0
    %26 = vst [vmem:[#allocation2 + $0x28] sm:$0xff] 0.0
    %27 = vst [vmem:[#allocation2 + $0x30] sm:$0xff] 0.0
    %28 = vst [vmem:[#allocation2 + $0x38] sm:$0xff] 0.0
    %29 = vst [vmem:[#allocation2 + $0x40] sm:$0xff] 0.0
    %30 = vst [vmem:[#allocation2 + $0x48] sm:$0xff] 0.0
    %31 = vst [vmem:[#allocation2 + $0x50] sm:$0xff] 0.0
    %32 = vst [vmem:[#allocation2 + $0x58] sm:$0xff] 0.0
    %33 = vst [vmem:[#allocation2 + $0x60] sm:$0xff] 0.0
    %34 = vst [vmem:[#allocation2 + $0x68] sm:$0xff] 0.0
    %35 = vst [vmem:[#allocation2 + $0x70] sm:$0xff] 0.0
    %36 = vst [vmem:[#allocation2 + $0x78] sm:$0xff] 0.0
  $region21: #{graph_unet_forward.23} parent=0 // pred_fallthru
    _
  %v37 = vld [vmem:[#allocation2] sm:$0xff]
  %v38 = vld [vmem:[#allocation2 + $0x8] sm:$0xff]
  %v39 = vld [vmem:[#allocation2 + $0x10] sm:$0xff]
  %v40 = vld [vmem:[#allocation2 + $0x18] sm:$0xff]
  %v41 = vld [vmem:[#allocation2 + $0x20] sm:$0xff]
  %v42 = vld [vmem:[#allocation2 + $0x28] sm:$0xff]
  %v43 = vld [vmem:[#allocation2 + $0x30] sm:$0xff]
  %v44 = vld [vmem:[#allocation2 + $0x38] sm:$0xff]
  %v45 = vld [vmem:[#allocation2 + $0x40] sm:$0xff]
  %v46 = vld [vmem:[#allocation2 + $0x48] sm:$0xff]
  %v47 = vld [vmem:[#allocation2 + $0x50] sm:$0xff]
  %v48 = vld [vmem:[#allocation2 + $0x58] sm:$0xff]
  %v49 = vld [vmem:[#allocation2 + $0x60] sm:$0xff]
  %v50 = vld [vmem:[#allocation2 + $0x68] sm:$0xff]
  %v51 = vld [vmem:[#allocation2 + $0x70] sm:$0xff]
  %v52 = vld [vmem:[#allocation2 + $0x78] sm:$0xff]
  %v53 = vld [vmem:[%s0] sm:$0xf]
  %v54 = vld [vmem:[%s0 + $0x4] sm:$0xf]
  %v55 = vld [vmem:[%s0 + $0x8] sm:$0xf]
  %v56 = vld [vmem:[%s0 + $0xc] sm:$0xf]
  %v57 = vld [vmem:[%s0 + $0x10] sm:$0xf]
  %v58 = vld [vmem:[%s0 + $0x14] sm:$0xf]
  %v59 = vld [vmem:[%s0 + $0x18] sm:$0xf]
  %v60 = vld [vmem:[%s0 + $0x1c] sm:$0xf]
  %v61 = vld [vmem:[%s0 + $0x20] sm:$0xf]
  %v62 = vld [vmem:[%s0 + $0x24] sm:$0xf]
  %v63 = vld [vmem:[%s0 + $0x28] sm:$0xf]
  %v64 = vld [vmem:[%s0 + $0x2c] sm:$0xf]
  %v65 = vld [vmem:[%s0 + $0x30] sm:$0xf]
  %v66 = vld [vmem:[%s0 + $0x34] sm:$0xf]
  %v67 = vld [vmem:[%s0 + $0x38] sm:$0xf]
  %v68 = vld [vmem:[%s0 + $0x3c] sm:$0xf]
  %v69 = vld [vmem:[%s1] sm:$0xf]
  %v70 = vld [vmem:[%s1 + $0x4] sm:$0xf]
  %v71 = vld [vmem:[%s1 + $0x8] sm:$0xf]
  %v72 = vld [vmem:[%s1 + $0xc] sm:$0xf]
  %v73 = vld [vmem:[%s1 + $0x10] sm:$0xf]
  %v74 = vld [vmem:[%s1 + $0x14] sm:$0xf]
  %v75 = vld [vmem:[%s1 + $0x18] sm:$0xf]
  %v76 = vld [vmem:[%s1 + $0x1c] sm:$0xf]
  %v77 = vld [vmem:[%s1 + $0x20] sm:$0xf]
  %v78 = vld [vmem:[%s1 + $0x24] sm:$0xf]
  %v79 = vld [vmem:[%s1 + $0x28] sm:$0xf]
  %v80 = vld [vmem:[%s1 + $0x2c] sm:$0xf]
  %v81 = vld [vmem:[%s1 + $0x30] sm:$0xf]
  %v82 = vld [vmem:[%s1 + $0x34] sm:$0xf]
  %v83 = vld [vmem:[%s1 + $0x38] sm:$0xf]
  %v84 = vld [vmem:[%s1 + $0x3c] sm:$0xf]
  %v101 = vunpack.c.l.b16 %v53
  %v102 = vunpack.c.l.b16 %v54
  %v103 = vunpack.c.l.b16 %v55
  %v104 = vunpack.c.l.b16 %v56
  %v105 = vunpack.c.l.b16 %v57
  %v106 = vunpack.c.l.b16 %v58
  %v107 = vunpack.c.l.b16 %v59
  %v108 = vunpack.c.l.b16 %v60
  %v109 = vunpack.c.l.b16 %v61
  %v110 = vunpack.c.l.b16 %v62
  %v111 = vunpack.c.l.b16 %v63
  %v112 = vunpack.c.l.b16 %v64
  %v113 = vunpack.c.l.b16 %v65
  %v114 = vunpack.c.l.b16 %v66
  %v115 = vunpack.c.l.b16 %v67
  %v116 = vunpack.c.l.b16 %v68
  %v117 = vpack.c.b16 %v102, %v101
  %v118 = vpack.c.b16 %v104, %v103
  %v119 = vpack.c.b16 %v106, %v105
  %v120 = vpack.c.b16 %v108, %v107
  %v121 = vpack.c.b16 %v110, %v109
  %v122 = vpack.c.b16 %v112, %v111
  %v123 = vpack.c.b16 %v114, %v113
  %v124 = vpack.c.b16 %v116, %v115
  %v149 = vunpack.c.l.b16 %v69
  %v150 = vunpack.c.l.b16 %v70
  %v151 = vunpack.c.l.b16 %v71
  %v152 = vunpack.c.l.b16 %v72
  %v153 = vunpack.c.l.b16 %v73
  %v154 = vunpack.c.l.b16 %v74
  %v155 = vunpack.c.l.b16 %v75
  %v156 = vunpack.c.l.b16 %v76
  %v157 = vunpack.c.l.b16 %v77
  %v158 = vunpack.c.l.b16 %v78
  %v159 = vunpack.c.l.b16 %v79
  %v160 = vunpack.c.l.b16 %v80
  %v161 = vunpack.c.l.b16 %v81
  %v162 = vunpack.c.l.b16 %v82
  %v163 = vunpack.c.l.b16 %v83
  %v164 = vunpack.c.l.b16 %v84
  %v165 = vpack.c.b16 %v150, %v149
  %v166 = vpack.c.b16 %v152, %v151
  %v167 = vpack.c.b16 %v154, %v153
  %v168 = vpack.c.b16 %v156, %v155
  %v169 = vpack.c.b16 %v158, %v157
  %v170 = vpack.c.b16 %v160, %v159
  %v171 = vpack.c.b16 %v162, %v161
  %v172 = vpack.c.b16 %v164, %v163
  %181 = vmatpush.bf16.msra.mxu0 %v172
  %182 = vmatpush.bf16.msra.mxu0 %v171
  %183 = vmatpush.bf16.msra.mxu0 %v170
  %184 = vmatpush.bf16.msra.mxu0 %v169
  %185 = vmatpush.bf16.msra.mxu0 %v168
  %186 = vmatpush.bf16.msra.mxu0 %v167
  %187 = vmatpush.bf16.msra.mxu0 %v166
  %188 = vmatpush.bf16.msra.mxu0 %v165
  %189 = vmatmul.bf16.gmra.mxu0 %v117
  %v190 = vpop.f32.mrf.mxu0
  %v191 = vadd.f32 0.0, %v190
  %v192 = vpop.f32.mrf.mxu0
  %v193 = vadd.f32 0.0, %v192
  %194 = vmatmul.bf16.gmra.mxu0 %v118
  %v195 = vpop.f32.mrf.mxu0
  %v196 = vadd.f32 0.0, %v195
  %v197 = vpop.f32.mrf.mxu0
  %v198 = vadd.f32 0.0, %v197
  %199 = vmatmul.bf16.gmra.mxu0 %v119
  %v200 = vpop.f32.mrf.mxu0
  %v201 = vadd.f32 0.0, %v200
  %v202 = vpop.f32.mrf.mxu0
  %v203 = vadd.f32 0.0, %v202
  %204 = vmatmul.bf16.gmra.mxu0 %v120
  %v205 = vpop.f32.mrf.mxu0
  %v206 = vadd.f32 0.0, %v205
  %v207 = vpop.f32.mrf.mxu0
  %v208 = vadd.f32 0.0, %v207
  %209 = vmatmul.bf16.gmra.mxu0 %v121
  %v210 = vpop.f32.mrf.mxu0
  %v211 = vadd.f32 0.0, %v210
  %v212 = vpop.f32.mrf.mxu0
  %v213 = vadd.f32 0.0, %v212
  %214 = vmatmul.bf16.gmra.mxu0 %v122
  %v215 = vpop.f32.mrf.mxu0
  %v216 = vadd.f32 0.0, %v215
  %v217 = vpop.f32.mrf.mxu0
  %v218 = vadd.f32 0.0, %v217
  %219 = vmatmul.bf16.gmra.mxu0 %v123
  %v220 = vpop.f32.mrf.mxu0
  %v221 = vadd.f32 0.0, %v220
  %v222 = vpop.f32.mrf.mxu0
  %v223 = vadd.f32 0.0, %v222
  %224 = vmatmul.bf16.gmra.mxu0 %v124
  %v225 = vpop.f32.mrf.mxu0
  %v226 = vadd.f32 0.0, %v225
  %v227 = vpop.f32.mrf.mxu0
  %v228 = vadd.f32 0.0, %v227
  %229 = vdwg.mxu0
  %v230 = vadd.f32 %v37, %v191
  %v231 = vadd.f32 %v38, %v193
  %v232 = vadd.f32 %v39, %v196
  %v233 = vadd.f32 %v40, %v198
  %v234 = vadd.f32 %v41, %v201
  %v235 = vadd.f32 %v42, %v203
  %v236 = vadd.f32 %v43, %v206
  %v237 = vadd.f32 %v44, %v208
  %v238 = vadd.f32 %v45, %v211
  %v239 = vadd.f32 %v46, %v213
  %v240 = vadd.f32 %v47, %v216
  %v241 = vadd.f32 %v48, %v218
  %v242 = vadd.f32 %v49, %v221
  %v243 = vadd.f32 %v50, %v223
  %v244 = vadd.f32 %v51, %v226
  %v245 = vadd.f32 %v52, %v228
  %246 = vst [vmem:[#allocation2] sm:$0xff] %v230
  %247 = vst [vmem:[#allocation2 + $0x8] sm:$0xff] %v231
  %248 = vst [vmem:[#allocation2 + $0x10] sm:$0xff] %v232
  %249 = vst [vmem:[#allocation2 + $0x18] sm:$0xff] %v233
  %250 = vst [vmem:[#allocation2 + $0x20] sm:$0xff] %v234
  %251 = vst [vmem:[#allocation2 + $0x28] sm:$0xff] %v235
  %252 = vst [vmem:[#allocation2 + $0x30] sm:$0xff] %v236
  %253 = vst [vmem:[#allocation2 + $0x38] sm:$0xff] %v237
  %254 = vst [vmem:[#allocation2 + $0x40] sm:$0xff] %v238
  %255 = vst [vmem:[#allocation2 + $0x48] sm:$0xff] %v239
  %256 = vst [vmem:[#allocation2 + $0x50] sm:$0xff] %v240
  %257 = vst [vmem:[#allocation2 + $0x58] sm:$0xff] %v241
  %258 = vst [vmem:[#allocation2 + $0x60] sm:$0xff] %v242
  %259 = vst [vmem:[#allocation2 + $0x68] sm:$0xff] %v243
  %260 = vst [vmem:[#allocation2 + $0x70] sm:$0xff] %v244
  %261 = vst [vmem:[#allocation2 + $0x78] sm:$0xff] %v245
  // Predicated region
  $region22: #{graph_unet_forward.23} parent=0 // pred_check
    %p262 = pneg %p17
  $region23: #{graph_unet_forward.23} parent=0 // pred_check_branch
    %264 = sbr.rel (%p262) target = $region25
  $region24: #{graph_unet_forward.23} parent=0 // pred_region
    %v265 = vld [vmem:[#allocation2] sm:$0xff]
    %v266 = vld [vmem:[#allocation2 + $0x8] sm:$0xff]
    %v267 = vld [vmem:[#allocation2 + $0x10] sm:$0xff]
    %v268 = vld [vmem:[#allocation2 + $0x18] sm:$0xff]
    %v269 = vld [vmem:[#allocation2 + $0x20] sm:$0xff]
    %v270 = vld [vmem:[#allocation2 + $0x28] sm:$0xff]
    %v271 = vld [vmem:[#allocation2 + $0x30] sm:$0xff]
    %v272 = vld [vmem:[#allocation2 + $0x38] sm:$0xff]
    %v273 = vld [vmem:[#allocation2 + $0x40] sm:$0xff]
    %v274 = vld [vmem:[#allocation2 + $0x48] sm:$0xff]
    %v275 = vld [vmem:[#allocation2 + $0x50] sm:$0xff]
    %v276 = vld [vmem:[#allocation2 + $0x58] sm:$0xff]
    %v277 = vld [vmem:[#allocation2 + $0x60] sm:$0xff]
    %v278 = vld [vmem:[#allocation2 + $0x68] sm:$0xff]
    %v279 = vld [vmem:[#allocation2 + $0x70] sm:$0xff]
    %v280 = vld [vmem:[#allocation2 + $0x78] sm:$0xff]
    %v281 = vld [vmem:[%s2] sm:$0x1]
    %v283 = vperm.slane %v281, 0
    %v285 = vadd.f32 %v265, %v283
    %v286 = vadd.f32 %v266, %v283
    %v287 = vadd.f32 %v267, %v283
    %v288 = vadd.f32 %v268, %v283
    %v289 = vadd.f32 %v269, %v283
    %v290 = vadd.f32 %v270, %v283
    %v291 = vadd.f32 %v271, %v283
    %v292 = vadd.f32 %v272, %v283
    %v293 = vadd.f32 %v273, %v283
    %v294 = vadd.f32 %v274, %v283
    %v295 = vadd.f32 %v275, %v283
    %v296 = vadd.f32 %v276, %v283
    %v297 = vadd.f32 %v277, %v283
    %v298 = vadd.f32 %v278, %v283
    %v299 = vadd.f32 %v279, %v283
    %v300 = vadd.f32 %v280, %v283
    %v301 = vld [vmem:[%s3] sm:$0xf]
    %v302 = vld [vmem:[%s3 + $0x4] sm:$0xf]
    %v303 = vld [vmem:[%s3 + $0x8] sm:$0xf]
    %v304 = vld [vmem:[%s3 + $0xc] sm:$0xf]
    %v305 = vld [vmem:[%s3 + $0x10] sm:$0xf]
    %v306 = vld [vmem:[%s3 + $0x14] sm:$0xf]
    %v307 = vld [vmem:[%s3 + $0x18] sm:$0xf]
    %v308 = vld [vmem:[%s3 + $0x1c] sm:$0xf]
    %v309 = vld [vmem:[%s3 + $0x20] sm:$0xf]
    %v310 = vld [vmem:[%s3 + $0x24] sm:$0xf]
    %v311 = vld [vmem:[%s3 + $0x28] sm:$0xf]
    %v312 = vld [vmem:[%s3 + $0x2c] sm:$0xf]
    %v313 = vld [vmem:[%s3 + $0x30] sm:$0xf]
    %v314 = vld [vmem:[%s3 + $0x34] sm:$0xf]
    %v315 = vld [vmem:[%s3 + $0x38] sm:$0xf]
    %v316 = vld [vmem:[%s3 + $0x3c] sm:$0xf]
    %v317 = vunpack.c.l.bf16 %v301
    %v318 = vunpack.c.l.bf16 %v302
    %v319 = vunpack.c.l.bf16 %v303
    %v320 = vunpack.c.l.bf16 %v304
    %v321 = vunpack.c.l.bf16 %v305
    %v322 = vunpack.c.l.bf16 %v306
    %v323 = vunpack.c.l.bf16 %v307
    %v324 = vunpack.c.l.bf16 %v308
    %v325 = vunpack.c.l.bf16 %v309
    %v326 = vunpack.c.l.bf16 %v310
    %v327 = vunpack.c.l.bf16 %v311
    %v328 = vunpack.c.l.bf16 %v312
    %v329 = vunpack.c.l.bf16 %v313
    %v330 = vunpack.c.l.bf16 %v314
    %v331 = vunpack.c.l.bf16 %v315
    %v332 = vunpack.c.l.bf16 %v316
    %v333 = vadd.f32 %v285, %v317
    %v334 = vadd.f32 %v286, %v318
    %v335 = vadd.f32 %v287, %v319
    %v336 = vadd.f32 %v288, %v320
    %v337 = vadd.f32 %v289, %v321
    %v338 = vadd.f32 %v290, %v322
    %v339 = vadd.f32 %v291, %v323
    %v340 = vadd.f32 %v292, %v324
    %v341 = vadd.f32 %v293, %v325
    %v342 = vadd.f32 %v294, %v326
    %v343 = vadd.f32 %v295, %v327
    %v344 = vadd.f32 %v296, %v328
    %v345 = vadd.f32 %v297, %v329
    %v346 = vadd.f32 %v298, %v330
    %v347 = vadd.f32 %v299, %v331
    %v348 = vadd.f32 %v300, %v332
    %v349 = vpack.c.bf16 %v333, %v333
    %v350 = vpack.c.bf16 %v334, %v334
    %v351 = vpack.c.bf16 %v335, %v335
    %v352 = vpack.c.bf16 %v336, %v336
    %v353 = vpack.c.bf16 %v337, %v337
    %v354 = vpack.c.bf16 %v338, %v338
    %v355 = vpack.c.bf16 %v339, %v339
    %v356 = vpack.c.bf16 %v340, %v340
    %v357 = vpack.c.bf16 %v341, %v341
    %v358 = vpack.c.bf16 %v342, %v342
    %v359 = vpack.c.bf16 %v343, %v343
    %v360 = vpack.c.bf16 %v344, %v344
    %v361 = vpack.c.bf16 %v345, %v345
    %v362 = vpack.c.bf16 %v346, %v346
    %v363 = vpack.c.bf16 %v347, %v347
    %v364 = vpack.c.bf16 %v348, %v348
    %365 = vst [vmem:[%s4] sm:$0xf] %v349
    %366 = vst [vmem:[%s4 + $0x4] sm:$0xf] %v350
    %367 = vst [vmem:[%s4 + $0x8] sm:$0xf] %v351
    %368 = vst [vmem:[%s4 + $0xc] sm:$0xf] %v352
    %369 = vst [vmem:[%s4 + $0x10] sm:$0xf] %v353
    %370 = vst [vmem:[%s4 + $0x14] sm:$0xf] %v354
    %371 = vst [vmem:[%s4 + $0x18] sm:$0xf] %v355
    %372 = vst [vmem:[%s4 + $0x1c] sm:$0xf] %v356
    %373 = vst [vmem:[%s4 + $0x20] sm:$0xf] %v357
    %374 = vst [vmem:[%s4 + $0x24] sm:$0xf] %v358
    %375 = vst [vmem:[%s4 + $0x28] sm:$0xf] %v359
    %376 = vst [vmem:[%s4 + $0x2c] sm:$0xf] %v360
    %377 = vst [vmem:[%s4 + $0x30] sm:$0xf] %v361
    %378 = vst [vmem:[%s4 + $0x34] sm:$0xf] %v362
    %379 = vst [vmem:[%s4 + $0x38] sm:$0xf] %v363
    %380 = vst [vmem:[%s4 + $0x3c] sm:$0xf] %v364
  $region25: #{graph_unet_forward.23} parent=0 // pred_fallthru
    _
  // Predicated region
  $region26: #{graph_unet_forward.23} parent=0 // pred_check
    _
  $region27: #{graph_unet_forward.23} parent=0 // pred_check_branch
    %382 = sbr.rel (0) target = $region29
  $region28: #{graph_unet_forward.23} parent=0 // pred_region
    _
  $region29: #{graph_unet_forward.23} parent=0 // pred_fallthru
    _
  // Predicated region
  $region30: #{graph_unet_forward.23} parent=0 // pred_check
    _
  $region31: #{graph_unet_forward.23} parent=0 // pred_check_branch
    %384 = sbr.rel (0) target = $region33
  $region32: #{graph_unet_forward.23} parent=0 // pred_region
    _
  $region33: #{graph_unet_forward.23} parent=0 // pred_fallthru
    _

</llo_original>
